<compile_context>
chip_gen: v7x
topology: tpu7x:2x2x1
jax: 0.10.0
libtpu: 0.0.40
codegen_flags: <defaults>
</compile_context>

<pallas_src>
import jax
import jax.numpy as jnp
from jax.experimental import pallas as pl
from jax.experimental.pallas import tpu as pltpu

NEG_MASK = -10e4  # torch convention (-1e5 literal): 0.0 = keep, -10e4 = masked
LANE = 128


def _round_up(x, m):
    return (x + m - 1) // m * m


# ----------------------------------------------------------------------------
# Fused per-batch kernel  (grid = (B,), batch axis "parallel")
# ----------------------------------------------------------------------------
def _fused_kernel(rx_ref, gx_ref, rw_ref, rb_ref, gw_ref, gb_ref,
                  rbox_ref, rboxt_ref, gbox_ref, gboxt_ref,
                  rproj_ref, gproj_ref, rmask_ref, gmask_ref,
                  r2all_ref, g2all_ref):
    """One batch element per grid step.

    rx_ref:    (N_r_p, D_r)  bf16      gx_ref:  (N_g_p, D_g)  bf16
    rw_ref:    (D_r, D_m_p)  bf16      rb_ref:  (1, D_m_p)    f32   (resident)
    gw_ref:    (D_g, D_m_p)  bf16      gb_ref:  (1, D_m_p)    f32   (resident)
    rbox_ref:  (N_r_p, 4)   region boxes, coords on lanes   (region->grid rows)
    rboxt_ref: (4, N_r_p)   region boxes, regions on lanes  (grid->region cols)
    gbox_ref:  (N_g_p, 4)   canonical grid cells            (grid->region rows)
    gboxt_ref: (4, N_g_p)   canonical grid cells, cells on lanes

    rproj_ref: (N_r_p, D_m_p)          gproj_ref: (N_g_p, D_m_p)
    rmask_ref: (1, N_r_p)              gmask_ref: (1, N_g_p)
    r2all_ref: (N_r_p, N_r_p + N_g_p)  g2all_ref: (N_g_p, N_r_p + N_g_p)
    All N_*_p are multiples of 128 -> every store below is lane-dense and the
    region|grid column seam is 128-aligned.
    """
    n_r = rx_ref.shape[0]
    n_g = gx_ref.shape[0]
    d_r = rx_ref.shape[1]
    d_g = gx_ref.shape[1]

    rx = rx_ref[...]
    gx = gx_ref[...]

    # ---- dense projections: bf16 operands, f32 MXU accumulation ----
    rproj_ref[...] = (jnp.dot(rx, rw_ref[...], preferred_element_type=jnp.float32)
                      + rb_ref[...]).astype(rproj_ref.dtype)
    gproj_ref[...] = (jnp.dot(gx, gw_ref[...], preferred_element_type=jnp.float32)
                      + gb_ref[...]).astype(gproj_ref.dtype)

    # ---- padding masks: lane-major row sums via ones @ x^T (NT MXU dot).
    #      All-zero (padding) rows sum to exactly 0.0 in any precision, so the
    #      exact equality test matches the upstream torch semantics.
    nt = (((1,), (1,)), ((), ()))
    r_sum = jax.lax.dot_general(jnp.ones((1, d_r), rx.dtype), rx, nt,
                                preferred_element_type=jnp.float32)   # (1, n_r)
    g_sum = jax.lax.dot_general(jnp.ones((1, d_g), gx.dtype), gx, nt,
                                preferred_element_type=jnp.float32)   # (1, n_g)
    r_pad = jnp.where(r_sum == 0.0, NEG_MASK, 0.0).astype(jnp.float32)
    g_pad = jnp.where(g_sum == 0.0, NEG_MASK, 0.0).astype(jnp.float32)
    rmask_ref[...] = r_pad
    gmask_ref[...] = g_pad

    # ---- geometric region<->grid overlap masks: pure broadcast VPU compares,
    #      both orientations available (no in-kernel transposes). ----
    rbox, rboxt = rbox_ref[...], rboxt_ref[...]
    gbox, gboxt = gbox_ref[...], gboxt_ref[...]

    crx1, cry1, crx2, cry2 = rbox[:, 0:1], rbox[:, 1:2], rbox[:, 2:3], rbox[:, 3:4]
    rrx1, rry1, rrx2, rry2 = rboxt[0:1, :], rboxt[1:2, :], rboxt[2:3, :], rboxt[3:4, :]
    cgx1, cgy1, cgx2, cgy2 = gbox[:, 0:1], gbox[:, 1:2], gbox[:, 2:3], gbox[:, 3:4]
    ggx1, ggy1, ggx2, ggy2 = gboxt[0:1, :], gboxt[1:2, :], gboxt[2:3, :], gboxt[3:4, :]

    # region->grid and grid->region tests are exact transposes of each other,
    # matching torch's permute(0, 1, 3, 2).
    r2g = (crx1 < ggx2) & (crx2 > ggx1) & (cry1 < ggy2) & (cry2 > ggy1)   # (n_r, n_g)
    g2r = (cgx1 < rrx2) & (cgx2 > rrx1) & (cgy1 < rry2) & (cgy2 > rry1)   # (n_g, n_r)
    r2g_m = jnp.where(r2g, 0.0, NEG_MASK).astype(jnp.float32)
    g2r_m = jnp.where(g2r, 0.0, NEG_MASK).astype(jnp.float32)

    # ---- combined mask slabs: two aligned direct stores each (no concat temp) ----
    r2all_ref[:, :n_r] = jnp.broadcast_to(r_pad, (n_r, n_r))
    r2all_ref[:, n_r:] = r2g_m
    g2all_ref[:, :n_r] = g2r_m
    g2all_ref[:, n_r:] = jnp.broadcast_to(g_pad, (n_g, n_g))


# ----------------------------------------------------------------------------
# Wrapper / glue
# ----------------------------------------------------------------------------
def _grid_cell_boxes(grid_size, n_cells):
    """Canonical uniform grid, row-major cell order, normalized (x1, y1, x2, y2).

    Cells beyond grid_size**2 (lane padding) are zeroed; they only feed mask
    columns that are sliced off in the wrapper.
    """
    idx = jnp.arange(n_cells)
    row = (idx // grid_size).astype(jnp.float32)
    col = (idx % grid_size).astype(jnp.float32)
    gs = float(grid_size)
    boxes = jnp.stack([col / gs, row / gs, (col + 1.0) / gs, (row + 1.0) / gs], axis=-1)
    valid = (idx < grid_size * grid_size)[:, None]
    return jnp.where(valid, boxes, 0.0).astype(jnp.float32)   # (n_cells, 4)


def init_params(key, d_region, d_grid, d_model):
    kr_w, kr_b, kg_w, kg_b = jax.random.split(key, 4)
    # torch nn.Linear default: U(-1/sqrt(fan_in), 1/sqrt(fan_in)); weights stored
    # pre-transposed as (D_in, D_model) so the kernel computes x @ W directly.
    br = 1.0 / (d_region ** 0.5)
    bg = 1.0 / (d_grid ** 0.5)
    return {
        "region_w": jax.random.uniform(kr_w, (d_region, d_model), jnp.float32, -br, br),
        "region_b": jax.random.uniform(kr_b, (1, d_model), jnp.float32, -br, br),
        "grid_w": jax.random.uniform(kg_w, (d_grid, d_model), jnp.float32, -bg, bg),
        "grid_b": jax.random.uniform(kg_b, (1, d_model), jnp.float32, -bg, bg),
    }


@jax.jit
def geometric_dual_feature_embedding(params, region_features, region_boxes,
                                     grid_features, grid_boxes):
    B, N_r, D_r = region_features.shape
    _, N_g, D_g = grid_features.shape
    D_m = params["region_w"].shape[1]
    grid_size = int(grid_boxes.shape[1] ** 0.5)

    N_r_p = _round_up(N_r, LANE)
    N_g_p = _round_up(N_g, LANE)
    D_m_p = _round_up(D_m, LANE)
    N_tot_p = N_r_p + N_g_p

    # Layout plumbing (cheap XLA ops, fused): cast MXU operands to bf16 and pad
    # the token dims / D_model to 128 multiples so every kernel store is
    # lane-dense and the region|grid seam of the slabs is 128-aligned.
    rx = jnp.pad(region_features.astype(jnp.bfloat16),
                 ((0, 0), (0, N_r_p - N_r), (0, 0)))               # (B, N_r_p, D_r)
    gx = jnp.pad(grid_features.astype(jnp.bfloat16),
                 ((0, 0), (0, N_g_p - N_g), (0, 0)))               # (B, N_g_p, D_g)
    rw = jnp.pad(params["region_w"].astype(jnp.bfloat16), ((0, 0), (0, D_m_p - D_m)))
    gw = jnp.pad(params["grid_w"].astype(jnp.bfloat16), ((0, 0), (0, D_m_p - D_m)))
    rb = jnp.pad(params["region_b"].astype(jnp.float32), ((0, 0), (0, D_m_p - D_m)))
    gb = jnp.pad(params["grid_b"].astype(jnp.float32), ((0, 0), (0, D_m_p - D_m)))

    rbox = jnp.pad(region_boxes.astype(jnp.float32),
                   ((0, 0), (0, N_r_p - N_r), (0, 0)))             # (B, N_r_p, 4)
    rbox_t = jnp.transpose(rbox, (0, 2, 1))                        # (B, 4, N_r_p)
    gbox = _grid_cell_boxes(grid_size, N_g_p)                      # (N_g_p, 4)
    gbox_t = gbox.T                                                # (4, N_g_p)

    out_shape = (
        jax.ShapeDtypeStruct((B, N_r_p, D_m_p), jnp.float32),      # rproj
        jax.ShapeDtypeStruct((B, N_g_p, D_m_p), jnp.float32),      # gproj
        jax.ShapeDtypeStruct((B, 1, N_r_p), jnp.float32),          # rmask
        jax.ShapeDtypeStruct((B, 1, N_g_p), jnp.float32),          # gmask
        jax.ShapeDtypeStruct((B, N_r_p, N_tot_p), jnp.float32),    # r2all
        jax.ShapeDtypeStruct((B, N_g_p, N_tot_p), jnp.float32),    # g2all
    )
    in_specs = [
        pl.BlockSpec((None, N_r_p, D_r), lambda b: (b, 0, 0)),     # rx (per batch)
        pl.BlockSpec((None, N_g_p, D_g), lambda b: (b, 0, 0)),     # gx (per batch)
        pl.BlockSpec((D_r, D_m_p), lambda b: (0, 0)),              # rw (resident)
        pl.BlockSpec((1, D_m_p), lambda b: (0, 0)),                # rb (resident)
        pl.BlockSpec((D_g, D_m_p), lambda b: (0, 0)),              # gw (resident)
        pl.BlockSpec((1, D_m_p), lambda b: (0, 0)),                # gb (resident)
        pl.BlockSpec((None, N_r_p, 4), lambda b: (b, 0, 0)),       # rbox
        pl.BlockSpec((None, 4, N_r_p), lambda b: (b, 0, 0)),       # rbox_t
        pl.BlockSpec((N_g_p, 4), lambda b: (0, 0)),                # gbox (resident)
        pl.BlockSpec((4, N_g_p), lambda b: (0, 0)),                # gbox_t (resident)
    ]
    out_specs = (
        pl.BlockSpec((None, N_r_p, D_m_p), lambda b: (b, 0, 0)),
        pl.BlockSpec((None, N_g_p, D_m_p), lambda b: (b, 0, 0)),
        pl.BlockSpec((None, 1, N_r_p), lambda b: (b, 0, 0)),
        pl.BlockSpec((None, 1, N_g_p), lambda b: (b, 0, 0)),
        pl.BlockSpec((None, N_r_p, N_tot_p), lambda b: (b, 0, 0)),
        pl.BlockSpec((None, N_g_p, N_tot_p), lambda b: (b, 0, 0)),
    )

    # Per-step VMEM footprint (double-buffered) is a few MiB even at production
    # B/N/D sizes, well under the scoped defaults on v5e (16 MiB) and the v7x
    # 64 MiB physical ceiling, so no vmem_limit_bytes override is needed.
    # TODO(synk): for very large per-batch N, add a second ("parallel") grid axis
    #             tiling the N rows at 256-512 per step.
    rproj, gproj, rmask, gmask, r2all, g2all = pl.pallas_call(
        _fused_kernel,
        grid=(B,),
        in_specs=in_specs,
        out_specs=out_specs,
        out_shape=out_shape,
        compiler_params=pltpu.CompilerParams(
            dimension_semantics=("parallel",)),
    )(rx, gx, rw, rb, gw, gb, rbox, rbox_t, gbox, gbox_t)

    # Un-pad back to the module's exact output shapes (layout plumbing only;
    # when N_r/N_g/D_m are already 128-aligned these slices are no-ops).
    region_proj = rproj[:, :N_r, :D_m]
    grid_proj = gproj[:, :N_g, :D_m]
    region_masks = rmask[:, :, :N_r].reshape(B, 1, 1, N_r)
    grid_masks = gmask[:, :, :N_g].reshape(B, 1, 1, N_g)

    if N_r == N_r_p and N_g == N_g_p:
        region2all = r2all[:, None]
        grid2all = g2all[:, None]
    else:
        region2all = jnp.concatenate(
            [r2all[:, :N_r, :N_r], r2all[:, :N_r, N_r_p:N_r_p + N_g]], axis=-1)[:, None]
        grid2all = jnp.concatenate(
            [g2all[:, :N_g, :N_r], g2all[:, :N_g, N_r_p:N_r_p + N_g]], axis=-1)[:, None]

    # dropout: inference-mode identity (the original applies grid_dropout to both)
    return ((region_proj, region_masks), (grid_proj, grid_masks),
            (region2all, grid2all))


# ----------------------------------------------------------------------------
# Pure-JAX reference (for a numerical sanity check)
# ----------------------------------------------------------------------------
def _reference(params, region_features, region_boxes, grid_features, grid_boxes):
    B, N_r, _ = region_features.shape
    _, N_g, _ = grid_features.shape
    grid_size = int(grid_boxes.shape[1] ** 0.5)
    rproj = region_features @ params["region_w"] + params["region_b"][0]
    gproj = grid_features @ params["grid_w"] + params["grid_b"][0]
    rmask = jnp.where(jnp.sum(region_features, -1) == 0.0, NEG_MASK, 0.0)[:, None, None, :]
    gmask = jnp.where(jnp.sum(grid_features, -1) == 0.0, NEG_MASK, 0.0)[:, None, None, :]
    gb = _grid_cell_boxes(grid_size, N_g)                              # (N_g, 4)
    r = region_boxes
    ov = ((r[..., 0:1] < gb[None, None, :, 2]) & (r[..., 2:3] > gb[None, None, :, 0]) &
          (r[..., 1:2] < gb[None, None, :, 3]) & (r[..., 3:4] > gb[None, None, :, 1]))
    r2g = jnp.where(ov, 0.0, NEG_MASK)[:, None]                        # (B,1,N_r,N_g)
    g2r = jnp.transpose(r2g, (0, 1, 3, 2))
    r2all = jnp.concatenate([jnp.broadcast_to(rmask, (B, 1, N_r, N_r)), r2g], axis=-1)
    g2all = jnp.concatenate([g2r, jnp.broadcast_to(gmask, (B, 1, N_g, N_g))], axis=-1)
    return ((rproj, rmask), (gproj, gmask), (r2all, g2all))


if __name__ == "__main__":
    key = jax.random.PRNGKey(0)
    B, N_R, N_G = 2, 8, 16            # N_G = 16 -> grid_size = 4
    D_REGION, D_GRID, D_MODEL = 32, 48, 64

    k_params, k_rf, k_gf, k_b1, k_b2 = jax.random.split(key, 5)
    params = init_params(k_params, D_REGION, D_GRID, D_MODEL)

    region_features = jax.random.normal(k_rf, (B, N_R, D_REGION), jnp.float32)
    region_features = region_features.at[1, 6:].set(0.0)     # padded region rows
    grid_features = jax.random.normal(k_gf, (B, N_G, D_GRID), jnp.float32)

    xy1 = jax.random.uniform(k_b1, (B, N_R, 2), jnp.float32, 0.0, 0.5)
    wh = jax.random.uniform(k_b2, (B, N_R, 2), jnp.float32, 0.1, 0.5)
    region_boxes = jnp.concatenate([xy1, jnp.clip(xy1 + wh, 0.0, 1.0)], axis=-1)
    region_boxes = region_boxes.at[1, 6:].set(0.0)            # padded region boxes
    grid_boxes = jnp.zeros((B, N_G, 4), jnp.float32)          # only its shape is used

    out = geometric_dual_feature_embedding(
        params, region_features, region_boxes, grid_features, grid_boxes)
    out = jax.block_until_ready(out)

    (rf, rm), (gf, gm), (r2a, g2a) = out
    assert rf.shape == (B, N_R, D_MODEL) and gf.shape == (B, N_G, D_MODEL)
    assert rm.shape == (B, 1, 1, N_R) and gm.shape == (B, 1, 1, N_G)
    assert r2a.shape == (B, 1, N_R, N_R + N_G) and g2a.shape == (B, 1, N_G, N_R + N_G)

    # numerical check against the pure-JAX (f32) reference; kernel matmuls are
    # bf16-operand / f32-accumulate, so allow a loose tolerance on projections.
    (rf_r, rm_r), (gf_r, gm_r), (r2a_r, g2a_r) = _reference(
        params, region_features, region_boxes, grid_features, grid_boxes)
    assert jnp.allclose(rf, rf_r, atol=5e-2, rtol=5e-2), "region projection mismatch"
    assert jnp.allclose(gf, gf_r, atol=5e-2, rtol=5e-2), "grid projection mismatch"
    assert jnp.array_equal(rm, rm_r), "region padding mask mismatch"
    assert jnp.array_equal(gm, gm_r), "grid padding mask mismatch"
    assert jnp.array_equal(r2a, r2a_r), "region2all mask mismatch"
    assert jnp.array_equal(g2a, g2a_r), "grid2all mask mismatch"

    print("KERNEL_OK")
</pallas_src>

<mosaic_0001>
module attributes {stable_mosaic.version = 11 : i64} {
  func.func @_fused_kernel(%arg0: i32, %arg1: memref<1x128x32xbf16, #tpu.memory_space<vmem>>, %arg2: memref<1x128x48xbf16, #tpu.memory_space<vmem>>, %arg3: memref<32x128xbf16, #tpu.memory_space<vmem>>, %arg4: memref<1x128xf32, #tpu.memory_space<vmem>>, %arg5: memref<48x128xbf16, #tpu.memory_space<vmem>>, %arg6: memref<1x128xf32, #tpu.memory_space<vmem>>, %arg7: memref<1x128x4xf32, #tpu.memory_space<vmem>>, %arg8: memref<1x4x128xf32, #tpu.memory_space<vmem>>, %arg9: memref<128x4xf32, #tpu.memory_space<vmem>>, %arg10: memref<4x128xf32, #tpu.memory_space<vmem>>, %arg11: memref<1x128x128xf32, #tpu.memory_space<vmem>>, %arg12: memref<1x128x128xf32, #tpu.memory_space<vmem>>, %arg13: memref<1x1x128xf32, #tpu.memory_space<vmem>>, %arg14: memref<1x1x128xf32, #tpu.memory_space<vmem>>, %arg15: memref<1x128x256xf32, #tpu.memory_space<vmem>>, %arg16: memref<1x128x256xf32, #tpu.memory_space<vmem>>) attributes {dimension_semantics = [#tpu.dimension_semantics<parallel>], iteration_bounds = array<i64: 2>, scalar_prefetch = 0 : i64, scratch_operands = 0 : i64, tpu.core_type = #tpu.core_type<tc>, window_params = [{transform_indices = @transform_0, window_bounds = array<i64: 1, 128, 32>}, {transform_indices = @transform_1, window_bounds = array<i64: 1, 128, 48>}, {pipeline_mode = #tpu.pipeline_mode<synchronous>, transform_indices = @transform_2, window_bounds = array<i64: 32, 128>}, {pipeline_mode = #tpu.pipeline_mode<synchronous>, transform_indices = @transform_3, window_bounds = array<i64: 1, 128>}, {pipeline_mode = #tpu.pipeline_mode<synchronous>, transform_indices = @transform_4, window_bounds = array<i64: 48, 128>}, {pipeline_mode = #tpu.pipeline_mode<synchronous>, transform_indices = @transform_5, window_bounds = array<i64: 1, 128>}, {transform_indices = @transform_6, window_bounds = array<i64: 1, 128, 4>}, {transform_indices = @transform_7, window_bounds = array<i64: 1, 4, 128>}, {pipeline_mode = #tpu.pipeline_mode<synchronous>, transform_indices = @transform_8, window_bounds = array<i64: 128, 4>}, {pipeline_mode = #tpu.pipeline_mode<synchronous>, transform_indices = @transform_9, window_bounds = array<i64: 4, 128>}, {transform_indices = @transform_10, window_bounds = array<i64: 1, 128, 128>}, {transform_indices = @transform_11, window_bounds = array<i64: 1, 128, 128>}, {transform_indices = @transform_12, window_bounds = array<i64: 1, 1, 128>}, {transform_indices = @transform_13, window_bounds = array<i64: 1, 1, 128>}, {transform_indices = @transform_14, window_bounds = array<i64: 1, 128, 256>}, {transform_indices = @transform_15, window_bounds = array<i64: 1, 128, 256>}]} {
    %c0 = arith.constant 0 : index
    %c0_0 = arith.constant 0 : index
    %c0_1 = arith.constant 0 : index
    %0 = vector.load %arg1[%c0, %c0_0, %c0_1] : memref<1x128x32xbf16, #tpu.memory_space<vmem>>, vector<1x128x32xbf16>
    %1 = vector.shape_cast %0 : vector<1x128x32xbf16> to vector<128x32xbf16>
    %c0_2 = arith.constant 0 : index
    %c0_3 = arith.constant 0 : index
    %c0_4 = arith.constant 0 : index
    %2 = vector.load %arg2[%c0_2, %c0_3, %c0_4] : memref<1x128x48xbf16, #tpu.memory_space<vmem>>, vector<1x128x48xbf16>
    %3 = vector.shape_cast %2 : vector<1x128x48xbf16> to vector<128x48xbf16>
    %c0_5 = arith.constant 0 : index
    %c0_6 = arith.constant 0 : index
    %4 = vector.load %arg3[%c0_5, %c0_6] : memref<32x128xbf16, #tpu.memory_space<vmem>>, vector<32x128xbf16>
    %cst = arith.constant dense<0.000000e+00> : vector<128x128xf32>
    %5 = tpu.matmul %1, %4, %cst {dimension_numbers = #tpu.dot_dimension_numbers<[1], [0], [0], [1], [0, 0, 1, 1], [], []>} : vector<128x32xbf16>, vector<32x128xbf16>, vector<128x128xf32> -> vector<128x128xf32>
    %c0_7 = arith.constant 0 : index
    %c0_8 = arith.constant 0 : index
    %6 = vector.load %arg4[%c0_7, %c0_8] : memref<1x128xf32, #tpu.memory_space<vmem>>, vector<1x128xf32>
    %7 = vector.broadcast %6 : vector<1x128xf32> to vector<128x128xf32>
    %8 = arith.addf %5, %7 : vector<128x128xf32>
    %c0_9 = arith.constant 0 : index
    %c0_10 = arith.constant 0 : index
    %c0_11 = arith.constant 0 : index
    %9 = vector.load %arg11[%c0_9, %c0_10, %c0_11] : memref<1x128x128xf32, #tpu.memory_space<vmem>>, vector<1x128x128xf32>
    %10 = vector.shape_cast %9 : vector<1x128x128xf32> to vector<128x128xf32>
    %11 = vector.shape_cast %8 : vector<128x128xf32> to vector<1x128x128xf32>
    tpu.vector_store %arg11[%c0_9, %c0_10, %c0_11], %11 {strides = array<i32>} : memref<1x128x128xf32, #tpu.memory_space<vmem>>, vector<1x128x128xf32>,
    %c0_12 = arith.constant 0 : index
    %c0_13 = arith.constant 0 : index
    %12 = vector.load %arg5[%c0_12, %c0_13] : memref<48x128xbf16, #tpu.memory_space<vmem>>, vector<48x128xbf16>
    %cst_14 = arith.constant dense<0.000000e+00> : vector<128x128xf32>
    %13 = tpu.matmul %3, %12, %cst_14 {dimension_numbers = #tpu.dot_dimension_numbers<[1], [0], [0], [1], [0, 0, 1, 1], [], []>} : vector<128x48xbf16>, vector<48x128xbf16>, vector<128x128xf32> -> vector<128x128xf32>
    %c0_15 = arith.constant 0 : index
    %c0_16 = arith.constant 0 : index
    %14 = vector.load %arg6[%c0_15, %c0_16] : memref<1x128xf32, #tpu.memory_space<vmem>>, vector<1x128xf32>
    %15 = vector.broadcast %14 : vector<1x128xf32> to vector<128x128xf32>
    %16 = arith.addf %13, %15 : vector<128x128xf32>
    %c0_17 = arith.constant 0 : index
    %c0_18 = arith.constant 0 : index
    %c0_19 = arith.constant 0 : index
    %17 = vector.load %arg12[%c0_17, %c0_18, %c0_19] : memref<1x128x128xf32, #tpu.memory_space<vmem>>, vector<1x128x128xf32>
    %18 = vector.shape_cast %17 : vector<1x128x128xf32> to vector<128x128xf32>
    %19 = vector.shape_cast %16 : vector<128x128xf32> to vector<1x128x128xf32>
    tpu.vector_store %arg12[%c0_17, %c0_18, %c0_19], %19 {strides = array<i32>} : memref<1x128x128xf32, #tpu.memory_space<vmem>>, vector<1x128x128xf32>,
    %cst_20 = arith.constant 1.000000e+00 : bf16
    %20 = vector.broadcast %cst_20 : bf16 to vector<1x32xbf16>
    %cst_21 = arith.constant dense<0.000000e+00> : vector<1x128xf32>
    %21 = tpu.matmul %20, %1, %cst_21 {dimension_numbers = #tpu.dot_dimension_numbers<[1], [1], [0], [0], [0, 0, 1, 0], [], []>} : vector<1x32xbf16>, vector<128x32xbf16>, vector<1x128xf32> -> vector<1x128xf32>
    %cst_22 = arith.constant 1.000000e+00 : bf16
    %22 = vector.broadcast %cst_22 : bf16 to vector<1x48xbf16>
    %cst_23 = arith.constant dense<0.000000e+00> : vector<1x128xf32>
    %23 = tpu.matmul %22, %3, %cst_23 {dimension_numbers = #tpu.dot_dimension_numbers<[1], [1], [0], [0], [0, 0, 1, 0], [], []>} : vector<1x48xbf16>, vector<128x48xbf16>, vector<1x128xf32> -> vector<1x128xf32>
    %cst_24 = arith.constant 0.000000e+00 : f32
    %24 = vector.broadcast %cst_24 : f32 to vector<1x128xf32>
    %25 = arith.cmpf oeq, %21, %24 : vector<1x128xf32>
    %cst_25 = arith.constant -1.000000e+05 : f32
    %cst_26 = arith.constant 0.000000e+00 : f32
    %26 = vector.broadcast %cst_25 : f32 to vector<1x128xf32>
    %27 = vector.broadcast %cst_26 : f32 to vector<1x128xf32>
    %28 = arith.select %25, %26, %27 : vector<1x128xi1>, vector<1x128xf32>
    %cst_27 = arith.constant 0.000000e+00 : f32
    %29 = vector.broadcast %cst_27 : f32 to vector<1x128xf32>
    %30 = arith.cmpf oeq, %23, %29 : vector<1x128xf32>
    %cst_28 = arith.constant -1.000000e+05 : f32
    %cst_29 = arith.constant 0.000000e+00 : f32
    %31 = vector.broadcast %cst_28 : f32 to vector<1x128xf32>
    %32 = vector.broadcast %cst_29 : f32 to vector<1x128xf32>
    %33 = arith.select %30, %31, %32 : vector<1x128xi1>, vector<1x128xf32>
    %c0_30 = arith.constant 0 : index
    %c0_31 = arith.constant 0 : index
    %c0_32 = arith.constant 0 : index
    %34 = vector.load %arg13[%c0_30, %c0_31, %c0_32] : memref<1x1x128xf32, #tpu.memory_space<vmem>>, vector<1x1x128xf32>
    %35 = vector.shape_cast %34 : vector<1x1x128xf32> to vector<1x128xf32>
    %36 = vector.shape_cast %28 : vector<1x128xf32> to vector<1x1x128xf32>
    tpu.vector_store %arg13[%c0_30, %c0_31, %c0_32], %36 {strides = array<i32>} : memref<1x1x128xf32, #tpu.memory_space<vmem>>, vector<1x1x128xf32>,
    %c0_33 = arith.constant 0 : index
    %c0_34 = arith.constant 0 : index
    %c0_35 = arith.constant 0 : index
    %37 = vector.load %arg14[%c0_33, %c0_34, %c0_35] : memref<1x1x128xf32, #tpu.memory_space<vmem>>, vector<1x1x128xf32>
    %38 = vector.shape_cast %37 : vector<1x1x128xf32> to vector<1x128xf32>
    %39 = vector.shape_cast %33 : vector<1x128xf32> to vector<1x1x128xf32>
    tpu.vector_store %arg14[%c0_33, %c0_34, %c0_35], %39 {strides = array<i32>} : memref<1x1x128xf32, #tpu.memory_space<vmem>>, vector<1x1x128xf32>,
    %c0_36 = arith.constant 0 : index
    %c0_37 = arith.constant 0 : index
    %c0_38 = arith.constant 0 : index
    %40 = vector.load %arg7[%c0_36, %c0_37, %c0_38] : memref<1x128x4xf32, #tpu.memory_space<vmem>>, vector<1x128x4xf32>
    %41 = vector.shape_cast %40 : vector<1x128x4xf32> to vector<128x4xf32>
    %c0_39 = arith.constant 0 : index
    %c0_40 = arith.constant 0 : index
    %c0_41 = arith.constant 0 : index
    %42 = vector.load %arg8[%c0_39, %c0_40, %c0_41] : memref<1x4x128xf32, #tpu.memory_space<vmem>>, vector<1x4x128xf32>
    %43 = vector.shape_cast %42 : vector<1x4x128xf32> to vector<4x128xf32>
    %c0_42 = arith.constant 0 : index
    %c0_43 = arith.constant 0 : index
    %44 = vector.load %arg9[%c0_42, %c0_43] : memref<128x4xf32, #tpu.memory_space<vmem>>, vector<128x4xf32>
    %c0_44 = arith.constant 0 : index
    %c0_45 = arith.constant 0 : index
    %45 = vector.load %arg10[%c0_44, %c0_45] : memref<4x128xf32, #tpu.memory_space<vmem>>, vector<4x128xf32>
    %46 = vector.extract_strided_slice %41 {offsets = [0, 0], sizes = [128, 1], strides = [1, 1]} : vector<128x4xf32> to vector<128x1xf32>
    %47 = vector.extract_strided_slice %41 {offsets = [0, 1], sizes = [128, 1], strides = [1, 1]} : vector<128x4xf32> to vector<128x1xf32>
    %48 = vector.extract_strided_slice %41 {offsets = [0, 2], sizes = [128, 1], strides = [1, 1]} : vector<128x4xf32> to vector<128x1xf32>
    %49 = vector.extract_strided_slice %41 {offsets = [0, 3], sizes = [128, 1], strides = [1, 1]} : vector<128x4xf32> to vector<128x1xf32>
    %50 = vector.extract_strided_slice %43 {offsets = [0, 0], sizes = [1, 128], strides = [1, 1]} : vector<4x128xf32> to vector<1x128xf32>
    %51 = vector.extract_strided_slice %43 {offsets = [1, 0], sizes = [1, 128], strides = [1, 1]} : vector<4x128xf32> to vector<1x128xf32>
    %52 = vector.extract_strided_slice %43 {offsets = [2, 0], sizes = [1, 128], strides = [1, 1]} : vector<4x128xf32> to vector<1x128xf32>
    %53 = vector.extract_strided_slice %43 {offsets = [3, 0], sizes = [1, 128], strides = [1, 1]} : vector<4x128xf32> to vector<1x128xf32>
    %54 = vector.extract_strided_slice %44 {offsets = [0, 0], sizes = [128, 1], strides = [1, 1]} : vector<128x4xf32> to vector<128x1xf32>
    %55 = vector.extract_strided_slice %44 {offsets = [0, 1], sizes = [128, 1], strides = [1, 1]} : vector<128x4xf32> to vector<128x1xf32>
    %56 = vector.extract_strided_slice %44 {offsets = [0, 2], sizes = [128, 1], strides = [1, 1]} : vector<128x4xf32> to vector<128x1xf32>
    %57 = vector.extract_strided_slice %44 {offsets = [0, 3], sizes = [128, 1], strides = [1, 1]} : vector<128x4xf32> to vector<128x1xf32>
    %58 = vector.extract_strided_slice %45 {offsets = [0, 0], sizes = [1, 128], strides = [1, 1]} : vector<4x128xf32> to vector<1x128xf32>
    %59 = vector.extract_strided_slice %45 {offsets = [1, 0], sizes = [1, 128], strides = [1, 1]} : vector<4x128xf32> to vector<1x128xf32>
    %60 = vector.extract_strided_slice %45 {offsets = [2, 0], sizes = [1, 128], strides = [1, 1]} : vector<4x128xf32> to vector<1x128xf32>
    %61 = vector.extract_strided_slice %45 {offsets = [3, 0], sizes = [1, 128], strides = [1, 1]} : vector<4x128xf32> to vector<1x128xf32>
    %62 = vector.broadcast %46 : vector<128x1xf32> to vector<128x128xf32>
    %63 = vector.broadcast %60 : vector<1x128xf32> to vector<128x128xf32>
    %64 = arith.cmpf olt, %62, %63 : vector<128x128xf32>
    %65 = vector.broadcast %48 : vector<128x1xf32> to vector<128x128xf32>
    %66 = vector.broadcast %58 : vector<1x128xf32> to vector<128x128xf32>
    %67 = arith.cmpf ogt, %65, %66 : vector<128x128xf32>
    %68 = arith.andi %64, %67 : vector<128x128xi1>
    %69 = vector.broadcast %47 : vector<128x1xf32> to vector<128x128xf32>
    %70 = vector.broadcast %61 : vector<1x128xf32> to vector<128x128xf32>
    %71 = arith.cmpf olt, %69, %70 : vector<128x128xf32>
    %72 = arith.andi %68, %71 : vector<128x128xi1>
    %73 = vector.broadcast %49 : vector<128x1xf32> to vector<128x128xf32>
    %74 = vector.broadcast %59 : vector<1x128xf32> to vector<128x128xf32>
    %75 = arith.cmpf ogt, %73, %74 : vector<128x128xf32>
    %76 = arith.andi %72, %75 : vector<128x128xi1>
    %77 = vector.broadcast %54 : vector<128x1xf32> to vector<128x128xf32>
    %78 = vector.broadcast %52 : vector<1x128xf32> to vector<128x128xf32>
    %79 = arith.cmpf olt, %77, %78 : vector<128x128xf32>
    %80 = vector.broadcast %56 : vector<128x1xf32> to vector<128x128xf32>
    %81 = vector.broadcast %50 : vector<1x128xf32> to vector<128x128xf32>
    %82 = arith.cmpf ogt, %80, %81 : vector<128x128xf32>
    %83 = arith.andi %79, %82 : vector<128x128xi1>
    %84 = vector.broadcast %55 : vector<128x1xf32> to vector<128x128xf32>
    %85 = vector.broadcast %53 : vector<1x128xf32> to vector<128x128xf32>
    %86 = arith.cmpf olt, %84, %85 : vector<128x128xf32>
    %87 = arith.andi %83, %86 : vector<128x128xi1>
    %88 = vector.broadcast %57 : vector<128x1xf32> to vector<128x128xf32>
    %89 = vector.broadcast %51 : vector<1x128xf32> to vector<128x128xf32>
    %90 = arith.cmpf ogt, %88, %89 : vector<128x128xf32>
    %91 = arith.andi %87, %90 : vector<128x128xi1>
    %cst_46 = arith.constant 0.000000e+00 : f32
    %cst_47 = arith.constant -1.000000e+05 : f32
    %92 = vector.broadcast %cst_46 : f32 to vector<128x128xf32>
    %93 = vector.broadcast %cst_47 : f32 to vector<128x128xf32>
    %94 = arith.select %76, %92, %93 : vector<128x128xi1>, vector<128x128xf32>
    %cst_48 = arith.constant 0.000000e+00 : f32
    %cst_49 = arith.constant -1.000000e+05 : f32
    %95 = vector.broadcast %cst_48 : f32 to vector<128x128xf32>
    %96 = vector.broadcast %cst_49 : f32 to vector<128x128xf32>
    %97 = arith.select %91, %95, %96 : vector<128x128xi1>, vector<128x128xf32>
    %98 = vector.shape_cast %28 : vector<1x128xf32> to vector<1x128xf32>
    %99 = vector.broadcast %98 : vector<1x128xf32> to vector<128x128xf32>
    %c0_50 = arith.constant 0 : index
    %c0_51 = arith.constant 0 : index
    %c0_52 = arith.constant 0 : index
    %100 = vector.load %arg15[%c0_50, %c0_51, %c0_52] : memref<1x128x256xf32, #tpu.memory_space<vmem>>, vector<1x128x128xf32>
    %101 = vector.shape_cast %100 : vector<1x128x128xf32> to vector<128x128xf32>
    %102 = vector.shape_cast %99 : vector<128x128xf32> to vector<1x128x128xf32>
    tpu.vector_store %arg15[%c0_50, %c0_51, %c0_52], %102 {strides = array<i32>} : memref<1x128x256xf32, #tpu.memory_space<vmem>>, vector<1x128x128xf32>,
    %c0_53 = arith.constant 0 : index
    %c0_54 = arith.constant 0 : index
    %c128 = arith.constant 128 : index
    %103 = vector.load %arg15[%c0_53, %c0_54, %c128] : memref<1x128x256xf32, #tpu.memory_space<vmem>>, vector<1x128x128xf32>
    %104 = vector.shape_cast %103 : vector<1x128x128xf32> to vector<128x128xf32>
    %105 = vector.shape_cast %94 : vector<128x128xf32> to vector<1x128x128xf32>
    tpu.vector_store %arg15[%c0_53, %c0_54, %c128], %105 {strides = array<i32>} : memref<1x128x256xf32, #tpu.memory_space<vmem>>, vector<1x128x128xf32>,
    %c0_55 = arith.constant 0 : index
    %c0_56 = arith.constant 0 : index
    %c0_57 = arith.constant 0 : index
    %106 = vector.load %arg16[%c0_55, %c0_56, %c0_57] : memref<1x128x256xf32, #tpu.memory_space<vmem>>, vector<1x128x128xf32>
    %107 = vector.shape_cast %106 : vector<1x128x128xf32> to vector<128x128xf32>
    %108 = vector.shape_cast %97 : vector<128x128xf32> to vector<1x128x128xf32>
    tpu.vector_store %arg16[%c0_55, %c0_56, %c0_57], %108 {strides = array<i32>} : memref<1x128x256xf32, #tpu.memory_space<vmem>>, vector<1x128x128xf32>,
    %109 = vector.shape_cast %33 : vector<1x128xf32> to vector<1x128xf32>
    %110 = vector.broadcast %109 : vector<1x128xf32> to vector<128x128xf32>
    %c0_58 = arith.constant 0 : index
    %c0_59 = arith.constant 0 : index
    %c128_60 = arith.constant 128 : index
    %111 = vector.load %arg16[%c0_58, %c0_59, %c128_60] : memref<1x128x256xf32, #tpu.memory_space<vmem>>, vector<1x128x128xf32>
    %112 = vector.shape_cast %111 : vector<1x128x128xf32> to vector<128x128xf32>
    %113 = vector.shape_cast %110 : vector<128x128xf32> to vector<1x128x128xf32>
    tpu.vector_store %arg16[%c0_58, %c0_59, %c128_60], %113 {strides = array<i32>} : memref<1x128x256xf32, #tpu.memory_space<vmem>>, vector<1x128x128xf32>,
    return
  }
  func.func @transform_0(%arg0: i32) -> (i32, i32, i32) {
    %c0_i32 = arith.constant 0 : i32
    %c0_i32_0 = arith.constant 0 : i32
    %c0_i32_1 = arith.constant 0 : i32
    return %arg0, %c0_i32, %c0_i32_0 : i32, i32, i32
  }
  func.func @transform_1(%arg0: i32) -> (i32, i32, i32) {
    %c0_i32 = arith.constant 0 : i32
    %c0_i32_0 = arith.constant 0 : i32
    %c0_i32_1 = arith.constant 0 : i32
    return %arg0, %c0_i32, %c0_i32_0 : i32, i32, i32
  }
  func.func @transform_2(%arg0: i32) -> (i32, i32) {
    %c0_i32 = arith.constant 0 : i32
    %c0_i32_0 = arith.constant 0 : i32
    %c0_i32_1 = arith.constant 0 : i32
    return %c0_i32, %c0_i32_0 : i32, i32
  }
  func.func @transform_3(%arg0: i32) -> (i32, i32) {
    %c0_i32 = arith.constant 0 : i32
    %c0_i32_0 = arith.constant 0 : i32
    %c0_i32_1 = arith.constant 0 : i32
    return %c0_i32, %c0_i32_0 : i32, i32
  }
  func.func @transform_4(%arg0: i32) -> (i32, i32) {
    %c0_i32 = arith.constant 0 : i32
    %c0_i32_0 = arith.constant 0 : i32
    %c0_i32_1 = arith.constant 0 : i32
    return %c0_i32, %c0_i32_0 : i32, i32
  }
  func.func @transform_5(%arg0: i32) -> (i32, i32) {
    %c0_i32 = arith.constant 0 : i32
    %c0_i32_0 = arith.constant 0 : i32
    %c0_i32_1 = arith.constant 0 : i32
    return %c0_i32, %c0_i32_0 : i32, i32
  }
  func.func @transform_6(%arg0: i32) -> (i32, i32, i32) {
    %c0_i32 = arith.constant 0 : i32
    %c0_i32_0 = arith.constant 0 : i32
    %c0_i32_1 = arith.constant 0 : i32
    return %arg0, %c0_i32, %c0_i32_0 : i32, i32, i32
  }
  func.func @transform_7(%arg0: i32) -> (i32, i32, i32) {
    %c0_i32 = arith.constant 0 : i32
    %c0_i32_0 = arith.constant 0 : i32
    %c0_i32_1 = arith.constant 0 : i32
    return %arg0, %c0_i32, %c0_i32_0 : i32, i32, i32
  }
  func.func @transform_8(%arg0: i32) -> (i32, i32) {
    %c0_i32 = arith.constant 0 : i32
    %c0_i32_0 = arith.constant 0 : i32
    %c0_i32_1 = arith.constant 0 : i32
    return %c0_i32, %c0_i32_0 : i32, i32
  }
  func.func @transform_9(%arg0: i32) -> (i32, i32) {
    %c0_i32 = arith.constant 0 : i32
    %c0_i32_0 = arith.constant 0 : i32
    %c0_i32_1 = arith.constant 0 : i32
    return %c0_i32, %c0_i32_0 : i32, i32
  }
  func.func @transform_10(%arg0: i32) -> (i32, i32, i32) {
    %c0_i32 = arith.constant 0 : i32
    %c0_i32_0 = arith.constant 0 : i32
    %c0_i32_1 = arith.constant 0 : i32
    return %arg0, %c0_i32, %c0_i32_0 : i32, i32, i32
  }
  func.func @transform_11(%arg0: i32) -> (i32, i32, i32) {
    %c0_i32 = arith.constant 0 : i32
    %c0_i32_0 = arith.constant 0 : i32
    %c0_i32_1 = arith.constant 0 : i32
    return %arg0, %c0_i32, %c0_i32_0 : i32, i32, i32
  }
  func.func @transform_12(%arg0: i32) -> (i32, i32, i32) {
    %c0_i32 = arith.constant 0 : i32
    %c0_i32_0 = arith.constant 0 : i32
    %c0_i32_1 = arith.constant 0 : i32
    return %arg0, %c0_i32, %c0_i32_0 : i32, i32, i32
  }
  func.func @transform_13(%arg0: i32) -> (i32, i32, i32) {
    %c0_i32 = arith.constant 0 : i32
    %c0_i32_0 = arith.constant 0 : i32
    %c0_i32_1 = arith.constant 0 : i32
    return %arg0, %c0_i32, %c0_i32_0 : i32, i32, i32
  }
  func.func @transform_14(%arg0: i32) -> (i32, i32, i32) {
    %c0_i32 = arith.constant 0 : i32
    %c0_i32_0 = arith.constant 0 : i32
    %c0_i32_1 = arith.constant 0 : i32
    return %arg0, %c0_i32, %c0_i32_0 : i32, i32, i32
  }
  func.func @transform_15(%arg0: i32) -> (i32, i32, i32) {
    %c0_i32 = arith.constant 0 : i32
    %c0_i32_0 = arith.constant 0 : i32
    %c0_i32_1 = arith.constant 0 : i32
    return %arg0, %c0_i32, %c0_i32_0 : i32, i32, i32
  }
}

</mosaic_0001>

<llo_original>
// kernel: geometric_dual_feature_embedding.1
$region0: #{geometric_dual_feature_embedding.1}
  #allocation0 [shape = 'u32[]', space=smem, size = 0x4, offset = 0x4, fixed_abs, tag = 'smem constant byte address 0x4 - core index']
  #allocation1 [shape = 'u32[144,128]{1,0:T(1,128)}', space=vmem, size = 0x12000, scoped, tag = 'internal scratch']
  %s0 = inlined_call_operand.vmem [shape: bf16[2,128,32], index: 0, kind: input, shape index: {}]
  %s1 = inlined_call_operand.vmem [shape: bf16[2,128,48], index: 1, kind: input, shape index: {}]
  %s2 = inlined_call_operand.vmem [shape: bf16[32,128], index: 2, kind: input, shape index: {}]
  %s3 = inlined_call_operand.vmem [shape: f32[1,128], index: 3, kind: input, shape index: {}]
  %s4 = inlined_call_operand.vmem [shape: bf16[48,128], index: 4, kind: input, shape index: {}]
  %s5 = inlined_call_operand.vmem [shape: f32[1,128], index: 5, kind: input, shape index: {}]
  %s6 = inlined_call_operand.vmem [shape: f32[2,128,4], index: 6, kind: input, shape index: {}]
  %s7 = inlined_call_operand.vmem [shape: f32[2,4,128], index: 7, kind: input, shape index: {}]
  %s8 = inlined_call_operand.vmem [shape: f32[128,4], index: 8, kind: input, shape index: {}]
  %s9 = inlined_call_operand.vmem [shape: f32[4,128], index: 9, kind: input, shape index: {}]
  %s10 = inlined_call_operand.vmem [shape: f32[2,128,128], index: 10, kind: output, shape index: {0}]
  %s11 = inlined_call_operand.vmem [shape: f32[2,128,128], index: 11, kind: output, shape index: {1}]
  %s12 = inlined_call_operand.vmem [shape: f32[2,1,128], index: 12, kind: output, shape index: {2}]
  %s13 = inlined_call_operand.vmem [shape: f32[2,1,128], index: 13, kind: output, shape index: {3}]
  %s14 = inlined_call_operand.vmem [shape: f32[2,128,256], index: 14, kind: output, shape index: {4}]
  %s15 = inlined_call_operand.vmem [shape: f32[2,128,256], index: 15, kind: output, shape index: {5}]
  %16 = xla_tuple %s10, %s11, %s12, %s13, %s14, %s15
  %s17 = sld [smem:[#allocation0]]
  $region113: #{geometric_dual_feature_embedding.1} parent=0
    _
  %s19 = ssub.s32 1, %s17
  %s20 = scalar_select 0, %s19, %s17
  loop: start=0, step=1, limit=4
  $region2: #{geometric_dual_feature_embedding.1} parent=0 // loop_pre_header
    _
  $region3: #{geometric_dual_feature_embedding.1} parent=0 // loop_header
    %s22 = sphi 0, %s26
    %p23 = scmp.ge.s32.totalorder %s22, 4
    %s32 = sphi 0, %s34
    %s35 = sphi 0, %s32
    %s36 = sphi 0, %s35
    %s52 = sphi 0, %s36
    %s58 = sphi 0, %s60
    %s61 = sphi 0, %s58
    %s62 = sphi 0, %s61
    %s78 = sphi 0, %s62
    %s82 = sphi 0, %s82
    %s84 = sphi 0, %s82
    %s85 = sphi 0, %s84
    %s99 = sphi 0, %s85
    %s103 = sphi 0, %s103
    %s105 = sphi 0, %s103
    %s106 = sphi 0, %s105
    %s120 = sphi 0, %s106
    %s124 = sphi 0, %s124
    %s126 = sphi 0, %s124
    %s127 = sphi 0, %s126
    %s141 = sphi 0, %s127
    %s145 = sphi 0, %s145
    %s147 = sphi 0, %s145
    %s148 = sphi 0, %s147
    %s162 = sphi 0, %s148
    %s168 = sphi 0, %s170
    %s171 = sphi 0, %s168
    %s172 = sphi 0, %s171
    %s188 = sphi 0, %s172
    %s194 = sphi 0, %s196
    %s197 = sphi 0, %s194
    %s198 = sphi 0, %s197
    %s214 = sphi 0, %s198
    %s218 = sphi 0, %s218
    %s220 = sphi 0, %s218
    %s221 = sphi 0, %s220
    %s235 = sphi 0, %s221
    %s239 = sphi 0, %s239
    %s241 = sphi 0, %s239
    %s242 = sphi 0, %s241
    %s256 = sphi 0, %s242
    %s262 = sphi 0, %s264
    %s265 = sphi 0, %s262
    %s266 = sphi 0, %s265
    %s282 = sphi 0, %s266
    %s288 = sphi 0, %s290
    %s291 = sphi 0, %s288
    %s292 = sphi 0, %s291
    %s308 = sphi 0, %s292
    %s314 = sphi 0, %s316
    %s317 = sphi 0, %s314
    %s318 = sphi 0, %s317
    %s334 = sphi 0, %s318
    %s340 = sphi 0, %s342
    %s343 = sphi 0, %s340
    %s344 = sphi 0, %s343
    %s360 = sphi 0, %s344
    %s366 = sphi 0, %s368
    %s369 = sphi 0, %s366
    %s370 = sphi 0, %s369
    %s386 = sphi 0, %s370
    %s392 = sphi 0, %s394
    %s395 = sphi 0, %s392
    %s396 = sphi 0, %s395
    %s412 = sphi 0, %s396
  $region4: #{geometric_dual_feature_embedding.1} parent=0 // loop_header_branch
    %25 = sbr.rel (%p23) target = $region8
  $region5: #{geometric_dual_feature_embedding.1} parent=0 // loop_body
    %s27 = ssub.s32 %s22, 1
    %s28 = ssub.s32 %s22, 2
    %s29 = sadd.s32 %s22, 1
    %s30 = ssub.s32 %s22, %s29
    %p31 = scmp.eq.s32.totalorder %s30, 0
    %s33 = sadd.s32 %s32, 1
    %s34 = scalar_select %p31, %s32, %s33
    %p37 = pneg %p31
    %p38 = scmp.eq.s32.totalorder %s22, 1
    %p39 = por %p37, %p38
    %p40 = scmp.ne.s32.totalorder %s32, %s35
    %p41 = scmp.eq.s32.totalorder %s22, 0
    %p42 = por %p40, %p41
    %p43 = scmp.ne.s32.totalorder %s32, %s35
    %p44 = scmp.eq.s32.totalorder %s27, 1
    %p45 = por %p43, %p44
    %p46 = scmp.ne.s32.totalorder %s35, %s36
    %p47 = scmp.eq.s32.totalorder %s27, 0
    %p48 = por %p46, %p47
    %p49 = scmp.ne.s32.totalorder %s35, %s36
    %p50 = scmp.eq.s32.totalorder %s28, 1
    %p51 = por %p49, %p50
    %p53 = scmp.ne.s32.totalorder %s36, %s52
    %p54 = scmp.eq.s32.totalorder %s28, 0
    %p55 = por %p53, %p54
    %s56 = ssub.s32 %s22, %s29
    %p57 = scmp.eq.s32.totalorder %s56, 0
    %s59 = sadd.s32 %s58, 1
    %s60 = scalar_select %p57, %s58, %s59
    %p63 = pneg %p57
    %p64 = scmp.eq.s32.totalorder %s22, 1
    %p65 = por %p63, %p64
    %p66 = scmp.ne.s32.totalorder %s58, %s61
    %p67 = scmp.eq.s32.totalorder %s22, 0
    %p68 = por %p66, %p67
    %p69 = scmp.ne.s32.totalorder %s58, %s61
    %p70 = scmp.eq.s32.totalorder %s27, 1
    %p71 = por %p69, %p70
    %p72 = scmp.ne.s32.totalorder %s61, %s62
    %p73 = scmp.eq.s32.totalorder %s27, 0
    %p74 = por %p72, %p73
    %p75 = scmp.ne.s32.totalorder %s61, %s62
    %p76 = scmp.eq.s32.totalorder %s28, 1
    %p77 = por %p75, %p76
    %p79 = scmp.ne.s32.totalorder %s62, %s78
    %p80 = scmp.eq.s32.totalorder %s28, 0
    %p81 = por %p79, %p80
    %s83 = sadd.s32 %s82, 1
    %p86 = scmp.eq.s32.totalorder %s22, 1
    %p87 = scmp.ne.s32.totalorder %s82, %s84
    %p88 = scmp.eq.s32.totalorder %s22, 0
    %p89 = por %p87, %p88
    %p90 = scmp.ne.s32.totalorder %s82, %s84
    %p91 = scmp.eq.s32.totalorder %s27, 1
    %p92 = por %p90, %p91
    %p93 = scmp.ne.s32.totalorder %s84, %s85
    %p94 = scmp.eq.s32.totalorder %s27, 0
    %p95 = por %p93, %p94
    %p96 = scmp.ne.s32.totalorder %s84, %s85
    %p97 = scmp.eq.s32.totalorder %s28, 1
    %p98 = por %p96, %p97
    %p100 = scmp.ne.s32.totalorder %s85, %s99
    %p101 = scmp.eq.s32.totalorder %s28, 0
    %p102 = por %p100, %p101
    %s104 = sadd.s32 %s103, 1
    %p107 = scmp.eq.s32.totalorder %s22, 1
    %p108 = scmp.ne.s32.totalorder %s103, %s105
    %p109 = scmp.eq.s32.totalorder %s22, 0
    %p110 = por %p108, %p109
    %p111 = scmp.ne.s32.totalorder %s103, %s105
    %p112 = scmp.eq.s32.totalorder %s27, 1
    %p113 = por %p111, %p112
    %p114 = scmp.ne.s32.totalorder %s105, %s106
    %p115 = scmp.eq.s32.totalorder %s27, 0
    %p116 = por %p114, %p115
    %p117 = scmp.ne.s32.totalorder %s105, %s106
    %p118 = scmp.eq.s32.totalorder %s28, 1
    %p119 = por %p117, %p118
    %p121 = scmp.ne.s32.totalorder %s106, %s120
    %p122 = scmp.eq.s32.totalorder %s28, 0
    %p123 = por %p121, %p122
    %s125 = sadd.s32 %s124, 1
    %p128 = scmp.eq.s32.totalorder %s22, 1
    %p129 = scmp.ne.s32.totalorder %s124, %s126
    %p130 = scmp.eq.s32.totalorder %s22, 0
    %p131 = por %p129, %p130
    %p132 = scmp.ne.s32.totalorder %s124, %s126
    %p133 = scmp.eq.s32.totalorder %s27, 1
    %p134 = por %p132, %p133
    %p135 = scmp.ne.s32.totalorder %s126, %s127
    %p136 = scmp.eq.s32.totalorder %s27, 0
    %p137 = por %p135, %p136
    %p138 = scmp.ne.s32.totalorder %s126, %s127
    %p139 = scmp.eq.s32.totalorder %s28, 1
    %p140 = por %p138, %p139
    %p142 = scmp.ne.s32.totalorder %s127, %s141
    %p143 = scmp.eq.s32.totalorder %s28, 0
    %p144 = por %p142, %p143
    %s146 = sadd.s32 %s145, 1
    %p149 = scmp.eq.s32.totalorder %s22, 1
    %p150 = scmp.ne.s32.totalorder %s145, %s147
    %p151 = scmp.eq.s32.totalorder %s22, 0
    %p152 = por %p150, %p151
    %p153 = scmp.ne.s32.totalorder %s145, %s147
    %p154 = scmp.eq.s32.totalorder %s27, 1
    %p155 = por %p153, %p154
    %p156 = scmp.ne.s32.totalorder %s147, %s148
    %p157 = scmp.eq.s32.totalorder %s27, 0
    %p158 = por %p156, %p157
    %p159 = scmp.ne.s32.totalorder %s147, %s148
    %p160 = scmp.eq.s32.totalorder %s28, 1
    %p161 = por %p159, %p160
    %p163 = scmp.ne.s32.totalorder %s148, %s162
    %p164 = scmp.eq.s32.totalorder %s28, 0
    %p165 = por %p163, %p164
    %s166 = ssub.s32 %s22, %s29
    %p167 = scmp.eq.s32.totalorder %s166, 0
    %s169 = sadd.s32 %s168, 1
    %s170 = scalar_select %p167, %s168, %s169
    %p173 = pneg %p167
    %p174 = scmp.eq.s32.totalorder %s22, 1
    %p175 = por %p173, %p174
    %p176 = scmp.ne.s32.totalorder %s168, %s171
    %p177 = scmp.eq.s32.totalorder %s22, 0
    %p178 = por %p176, %p177
    %p179 = scmp.ne.s32.totalorder %s168, %s171
    %p180 = scmp.eq.s32.totalorder %s27, 1
    %p181 = por %p179, %p180
    %p182 = scmp.ne.s32.totalorder %s171, %s172
    %p183 = scmp.eq.s32.totalorder %s27, 0
    %p184 = por %p182, %p183
    %p185 = scmp.ne.s32.totalorder %s171, %s172
    %p186 = scmp.eq.s32.totalorder %s28, 1
    %p187 = por %p185, %p186
    %p189 = scmp.ne.s32.totalorder %s172, %s188
    %p190 = scmp.eq.s32.totalorder %s28, 0
    %p191 = por %p189, %p190
    %s192 = ssub.s32 %s22, %s29
    %p193 = scmp.eq.s32.totalorder %s192, 0
    %s195 = sadd.s32 %s194, 1
    %s196 = scalar_select %p193, %s194, %s195
    %p199 = pneg %p193
    %p200 = scmp.eq.s32.totalorder %s22, 1
    %p201 = por %p199, %p200
    %p202 = scmp.ne.s32.totalorder %s194, %s197
    %p203 = scmp.eq.s32.totalorder %s22, 0
    %p204 = por %p202, %p203
    %p205 = scmp.ne.s32.totalorder %s194, %s197
    %p206 = scmp.eq.s32.totalorder %s27, 1
    %p207 = por %p205, %p206
    %p208 = scmp.ne.s32.totalorder %s197, %s198
    %p209 = scmp.eq.s32.totalorder %s27, 0
    %p210 = por %p208, %p209
    %p211 = scmp.ne.s32.totalorder %s197, %s198
    %p212 = scmp.eq.s32.totalorder %s28, 1
    %p213 = por %p211, %p212
    %p215 = scmp.ne.s32.totalorder %s198, %s214
    %p216 = scmp.eq.s32.totalorder %s28, 0
    %p217 = por %p215, %p216
    %s219 = sadd.s32 %s218, 1
    %p222 = scmp.eq.s32.totalorder %s22, 1
    %p223 = scmp.ne.s32.totalorder %s218, %s220
    %p224 = scmp.eq.s32.totalorder %s22, 0
    %p225 = por %p223, %p224
    %p226 = scmp.ne.s32.totalorder %s218, %s220
    %p227 = scmp.eq.s32.totalorder %s27, 1
    %p228 = por %p226, %p227
    %p229 = scmp.ne.s32.totalorder %s220, %s221
    %p230 = scmp.eq.s32.totalorder %s27, 0
    %p231 = por %p229, %p230
    %p232 = scmp.ne.s32.totalorder %s220, %s221
    %p233 = scmp.eq.s32.totalorder %s28, 1
    %p234 = por %p232, %p233
    %p236 = scmp.ne.s32.totalorder %s221, %s235
    %p237 = scmp.eq.s32.totalorder %s28, 0
    %p238 = por %p236, %p237
    %s240 = sadd.s32 %s239, 1
    %p243 = scmp.eq.s32.totalorder %s22, 1
    %p244 = scmp.ne.s32.totalorder %s239, %s241
    %p245 = scmp.eq.s32.totalorder %s22, 0
    %p246 = por %p244, %p245
    %p247 = scmp.ne.s32.totalorder %s239, %s241
    %p248 = scmp.eq.s32.totalorder %s27, 1
    %p249 = por %p247, %p248
    %p250 = scmp.ne.s32.totalorder %s241, %s242
    %p251 = scmp.eq.s32.totalorder %s27, 0
    %p252 = por %p250, %p251
    %p253 = scmp.ne.s32.totalorder %s241, %s242
    %p254 = scmp.eq.s32.totalorder %s28, 1
    %p255 = por %p253, %p254
    %p257 = scmp.ne.s32.totalorder %s242, %s256
    %p258 = scmp.eq.s32.totalorder %s28, 0
    %p259 = por %p257, %p258
    %s260 = ssub.s32 %s22, %s29
    %p261 = scmp.eq.s32.totalorder %s260, 0
    %s263 = sadd.s32 %s262, 1
    %s264 = scalar_select %p261, %s262, %s263
    %p267 = pneg %p261
    %p268 = scmp.eq.s32.totalorder %s22, 1
    %p269 = por %p267, %p268
    %p270 = scmp.ne.s32.totalorder %s262, %s265
    %p271 = scmp.eq.s32.totalorder %s22, 0
    %p272 = por %p270, %p271
    %p273 = scmp.ne.s32.totalorder %s262, %s265
    %p274 = scmp.eq.s32.totalorder %s27, 1
    %p275 = por %p273, %p274
    %p276 = scmp.ne.s32.totalorder %s265, %s266
    %p277 = scmp.eq.s32.totalorder %s27, 0
    %p278 = por %p276, %p277
    %p279 = scmp.ne.s32.totalorder %s265, %s266
    %p280 = scmp.eq.s32.totalorder %s28, 1
    %p281 = por %p279, %p280
    %p283 = scmp.ne.s32.totalorder %s266, %s282
    %p284 = scmp.eq.s32.totalorder %s28, 0
    %p285 = por %p283, %p284
    %s286 = ssub.s32 %s22, %s29
    %p287 = scmp.eq.s32.totalorder %s286, 0
    %s289 = sadd.s32 %s288, 1
    %s290 = scalar_select %p287, %s288, %s289
    %p293 = pneg %p287
    %p294 = scmp.eq.s32.totalorder %s22, 1
    %p295 = por %p293, %p294
    %p296 = scmp.ne.s32.totalorder %s288, %s291
    %p297 = scmp.eq.s32.totalorder %s22, 0
    %p298 = por %p296, %p297
    %p299 = scmp.ne.s32.totalorder %s288, %s291
    %p300 = scmp.eq.s32.totalorder %s27, 1
    %p301 = por %p299, %p300
    %p302 = scmp.ne.s32.totalorder %s291, %s292
    %p303 = scmp.eq.s32.totalorder %s27, 0
    %p304 = por %p302, %p303
    %p305 = scmp.ne.s32.totalorder %s291, %s292
    %p306 = scmp.eq.s32.totalorder %s28, 1
    %p307 = por %p305, %p306
    %p309 = scmp.ne.s32.totalorder %s292, %s308
    %p310 = scmp.eq.s32.totalorder %s28, 0
    %p311 = por %p309, %p310
    %s312 = ssub.s32 %s22, %s29
    %p313 = scmp.eq.s32.totalorder %s312, 0
    %s315 = sadd.s32 %s314, 1
    %s316 = scalar_select %p313, %s314, %s315
    %p319 = pneg %p313
    %p320 = scmp.eq.s32.totalorder %s22, 1
    %p321 = por %p319, %p320
    %p322 = scmp.ne.s32.totalorder %s314, %s317
    %p323 = scmp.eq.s32.totalorder %s22, 0
    %p324 = por %p322, %p323
    %p325 = scmp.ne.s32.totalorder %s314, %s317
    %p326 = scmp.eq.s32.totalorder %s27, 1
    %p327 = por %p325, %p326
    %p328 = scmp.ne.s32.totalorder %s317, %s318
    %p329 = scmp.eq.s32.totalorder %s27, 0
    %p330 = por %p328, %p329
    %p331 = scmp.ne.s32.totalorder %s317, %s318
    %p332 = scmp.eq.s32.totalorder %s28, 1
    %p333 = por %p331, %p332
    %p335 = scmp.ne.s32.totalorder %s318, %s334
    %p336 = scmp.eq.s32.totalorder %s28, 0
    %p337 = por %p335, %p336
    %s338 = ssub.s32 %s22, %s29
    %p339 = scmp.eq.s32.totalorder %s338, 0
    %s341 = sadd.s32 %s340, 1
    %s342 = scalar_select %p339, %s340, %s341
    %p345 = pneg %p339
    %p346 = scmp.eq.s32.totalorder %s22, 1
    %p347 = por %p345, %p346
    %p348 = scmp.ne.s32.totalorder %s340, %s343
    %p349 = scmp.eq.s32.totalorder %s22, 0
    %p350 = por %p348, %p349
    %p351 = scmp.ne.s32.totalorder %s340, %s343
    %p352 = scmp.eq.s32.totalorder %s27, 1
    %p353 = por %p351, %p352
    %p354 = scmp.ne.s32.totalorder %s343, %s344
    %p355 = scmp.eq.s32.totalorder %s27, 0
    %p356 = por %p354, %p355
    %p357 = scmp.ne.s32.totalorder %s343, %s344
    %p358 = scmp.eq.s32.totalorder %s28, 1
    %p359 = por %p357, %p358
    %p361 = scmp.ne.s32.totalorder %s344, %s360
    %p362 = scmp.eq.s32.totalorder %s28, 0
    %p363 = por %p361, %p362
    %s364 = ssub.s32 %s22, %s29
    %p365 = scmp.eq.s32.totalorder %s364, 0
    %s367 = sadd.s32 %s366, 1
    %s368 = scalar_select %p365, %s366, %s367
    %p371 = pneg %p365
    %p372 = scmp.eq.s32.totalorder %s22, 1
    %p373 = por %p371, %p372
    %p374 = scmp.ne.s32.totalorder %s366, %s369
    %p375 = scmp.eq.s32.totalorder %s22, 0
    %p376 = por %p374, %p375
    %p377 = scmp.ne.s32.totalorder %s366, %s369
    %p378 = scmp.eq.s32.totalorder %s27, 1
    %p379 = por %p377, %p378
    %p380 = scmp.ne.s32.totalorder %s369, %s370
    %p381 = scmp.eq.s32.totalorder %s27, 0
    %p382 = por %p380, %p381
    %p383 = scmp.ne.s32.totalorder %s369, %s370
    %p384 = scmp.eq.s32.totalorder %s28, 1
    %p385 = por %p383, %p384
    %p387 = scmp.ne.s32.totalorder %s370, %s386
    %p388 = scmp.eq.s32.totalorder %s28, 0
    %p389 = por %p387, %p388
    %s390 = ssub.s32 %s22, %s29
    %p391 = scmp.eq.s32.totalorder %s390, 0
    %s393 = sadd.s32 %s392, 1
    %s394 = scalar_select %p391, %s392, %s393
    %p397 = pneg %p391
    %p398 = scmp.eq.s32.totalorder %s22, 1
    %p399 = por %p397, %p398
    %p400 = scmp.ne.s32.totalorder %s392, %s395
    %p401 = scmp.eq.s32.totalorder %s22, 0
    %p402 = por %p400, %p401
    %p403 = scmp.ne.s32.totalorder %s392, %s395
    %p404 = scmp.eq.s32.totalorder %s27, 1
    %p405 = por %p403, %p404
    %p406 = scmp.ne.s32.totalorder %s395, %s396
    %p407 = scmp.eq.s32.totalorder %s27, 0
    %p408 = por %p406, %p407
    %p409 = scmp.ne.s32.totalorder %s395, %s396
    %p410 = scmp.eq.s32.totalorder %s28, 1
    %p411 = por %p409, %p410
    %p413 = scmp.ne.s32.totalorder %s396, %s412
    %p414 = scmp.eq.s32.totalorder %s28, 0
    %p415 = por %p413, %p414
    %p416 = scmp.le.s32.totalorder 1, %s22
    %p417 = scmp.lt.s32.totalorder %s22, 3
    %p418 = pnand %p416, %p417
    %p419 = pneg %p418
    // Predicated region
    $region9: #{geometric_dual_feature_embedding.1} parent=5 // pred_check
      _
    $region10: #{geometric_dual_feature_embedding.1} parent=5 // pred_check_branch
      %421 = sbr.rel (%p418) target = $region12
    $region11: #{geometric_dual_feature_embedding.1} parent=5 // pred_region
      %s422 = ssub.s32 %s22, 1
      // Predicated region
      $region13: #{geometric_dual_feature_embedding.1} parent=11 // pred_check
        %p423 = pneg %p95
      $region14: #{geometric_dual_feature_embedding.1} parent=11 // pred_check_branch
        %425 = sbr.rel (%p423) target = $region16
      $region15: #{geometric_dual_feature_embedding.1} parent=11 // pred_region
        _
      $region16: #{geometric_dual_feature_embedding.1} parent=11 // pred_fallthru
        _
      // Predicated region
      $region17: #{geometric_dual_feature_embedding.1} parent=11 // pred_check
        %p426 = pneg %p116
      $region18: #{geometric_dual_feature_embedding.1} parent=11 // pred_check_branch
        %428 = sbr.rel (%p426) target = $region20
      $region19: #{geometric_dual_feature_embedding.1} parent=11 // pred_region
        _
      $region20: #{geometric_dual_feature_embedding.1} parent=11 // pred_fallthru
        _
      // Predicated region
      $region21: #{geometric_dual_feature_embedding.1} parent=11 // pred_check
        %p429 = pneg %p137
      $region22: #{geometric_dual_feature_embedding.1} parent=11 // pred_check_branch
        %431 = sbr.rel (%p429) target = $region24
      $region23: #{geometric_dual_feature_embedding.1} parent=11 // pred_region
        _
      $region24: #{geometric_dual_feature_embedding.1} parent=11 // pred_fallthru
        _
      // Predicated region
      $region25: #{geometric_dual_feature_embedding.1} parent=11 // pred_check
        %p432 = pneg %p158
      $region26: #{geometric_dual_feature_embedding.1} parent=11 // pred_check_branch
        %434 = sbr.rel (%p432) target = $region28
      $region27: #{geometric_dual_feature_embedding.1} parent=11 // pred_region
        _
      $region28: #{geometric_dual_feature_embedding.1} parent=11 // pred_fallthru
        _
      // Predicated region
      $region29: #{geometric_dual_feature_embedding.1} parent=11 // pred_check
        %p435 = pneg %p231
      $region30: #{geometric_dual_feature_embedding.1} parent=11 // pred_check_branch
        %437 = sbr.rel (%p435) target = $region32
      $region31: #{geometric_dual_feature_embedding.1} parent=11 // pred_region
        _
      $region32: #{geometric_dual_feature_embedding.1} parent=11 // pred_fallthru
        _
      // Predicated region
      $region33: #{geometric_dual_feature_embedding.1} parent=11 // pred_check
        %p438 = pneg %p252
      $region34: #{geometric_dual_feature_embedding.1} parent=11 // pred_check_branch
        %440 = sbr.rel (%p438) target = $region36
      $region35: #{geometric_dual_feature_embedding.1} parent=11 // pred_region
        _
      $region36: #{geometric_dual_feature_embedding.1} parent=11 // pred_fallthru
        _
    $region12: #{geometric_dual_feature_embedding.1} parent=5 // pred_fallthru
      _
    %p441 = scmp.lt.s32.totalorder %s22, 2
    // Predicated region
    $region37: #{geometric_dual_feature_embedding.1} parent=5 // pred_check
      %p442 = pneg %p441
    $region38: #{geometric_dual_feature_embedding.1} parent=5 // pred_check_branch
      %444 = sbr.rel (%p442) target = $region40
    $region39: #{geometric_dual_feature_embedding.1} parent=5 // pred_region
      // Predicated region
      $region41: #{geometric_dual_feature_embedding.1} parent=39 // pred_check
        %p445 = pneg %p42
      $region42: #{geometric_dual_feature_embedding.1} parent=39 // pred_check_branch
        %447 = sbr.rel (%p445) target = $region44
      $region43: #{geometric_dual_feature_embedding.1} parent=39 // pred_region
        %p448 = scmp.lt.s32.totalorder %s22, 1
        %s449 = scalar_select %p448, %s22, 1
        %s450 = smul.addr %s449, 16
        %s451 = smul.addr %s450, 4
        %s452 = scalar_lea.vmem %s0, %s451
      $region44: #{geometric_dual_feature_embedding.1} parent=39 // pred_fallthru
        _
      // Predicated region
      $region45: #{geometric_dual_feature_embedding.1} parent=39 // pred_check
        %p453 = pneg %p68
      $region46: #{geometric_dual_feature_embedding.1} parent=39 // pred_check_branch
        %455 = sbr.rel (%p453) target = $region48
      $region47: #{geometric_dual_feature_embedding.1} parent=39 // pred_region
        %p456 = scmp.lt.s32.totalorder %s22, 1
        %s457 = scalar_select %p456, %s22, 1
        %s458 = smul.addr %s457, 16
        %s459 = smul.addr %s458, 4
        %s460 = scalar_lea.vmem %s1, %s459
      $region48: #{geometric_dual_feature_embedding.1} parent=39 // pred_fallthru
        _
      // Predicated region
      $region49: #{geometric_dual_feature_embedding.1} parent=39 // pred_check
        %p461 = pneg %p178
      $region50: #{geometric_dual_feature_embedding.1} parent=39 // pred_check_branch
        %463 = sbr.rel (%p461) target = $region52
      $region51: #{geometric_dual_feature_embedding.1} parent=39 // pred_region
        %p464 = scmp.lt.s32.totalorder %s22, 1
        %s465 = scalar_select %p464, %s22, 1
        %s466 = smul.addr %s465, 16
        %s467 = smul.addr %s466, 8
        %s468 = scalar_lea.vmem %s6, %s467
      $region52: #{geometric_dual_feature_embedding.1} parent=39 // pred_fallthru
        _
      // Predicated region
      $region53: #{geometric_dual_feature_embedding.1} parent=39 // pred_check
        %p469 = pneg %p204
      $region54: #{geometric_dual_feature_embedding.1} parent=39 // pred_check_branch
        %471 = sbr.rel (%p469) target = $region56
      $region55: #{geometric_dual_feature_embedding.1} parent=39 // pred_region
        %p472 = scmp.lt.s32.totalorder %s22, 1
        %s473 = scalar_select %p472, %s22, 1
        %s474 = smul.addr %s473, 4
        %s475 = scalar_lea.vmem %s7, %s474
      $region56: #{geometric_dual_feature_embedding.1} parent=39 // pred_fallthru
        _
    $region40: #{geometric_dual_feature_embedding.1} parent=5 // pred_fallthru
      _
    %p476 = scmp.le.s32.totalorder 1, %s22
    %p477 = scmp.lt.s32.totalorder %s22, 3
    %p478 = pnand %p476, %p477
    %p479 = pneg %p478
    // Predicated region
    $region57: #{geometric_dual_feature_embedding.1} parent=5 // pred_check
      _
    $region58: #{geometric_dual_feature_embedding.1} parent=5 // pred_check_branch
      %481 = sbr.rel (%p478) target = $region60
    $region59: #{geometric_dual_feature_embedding.1} parent=5 // pred_region
      %s482 = ssub.s32 %s22, 1
      %p483 = scmp.lt.s32.totalorder %s27, 1
      %s484 = scalar_select %p483, %s27, 1
      %s485 = smul.addr %s484, 16
      %s486 = smul.addr %s485, 4
      %s487 = scalar_lea.vmem %s0, %s486
      %p488 = pneg %p48
      %p489 = pneg %p45
      %p490 = scmp.lt.s32.totalorder %s27, 1
      %s491 = scalar_select %p490, %s27, 1
      %s492 = smul.addr %s491, 16
      %s493 = smul.addr %s492, 4
      %s494 = scalar_lea.vmem %s1, %s493
      %p495 = pneg %p74
      %p496 = pneg %p71
      %p497 = pneg %p95
      %p498 = pneg %p92
      %p499 = pneg %p116
      %p500 = pneg %p113
      %p501 = pneg %p137
      %p502 = pneg %p134
      %p503 = pneg %p158
      %p504 = pneg %p155
      %p505 = scmp.lt.s32.totalorder %s27, 1
      %s506 = scalar_select %p505, %s27, 1
      %s507 = smul.addr %s506, 16
      %s508 = smul.addr %s507, 8
      %s509 = scalar_lea.vmem %s6, %s508
      %p510 = pneg %p184
      %p511 = pneg %p181
      %p512 = scmp.lt.s32.totalorder %s27, 1
      %s513 = scalar_select %p512, %s27, 1
      %s514 = smul.addr %s513, 4
      %s515 = scalar_lea.vmem %s7, %s514
      %p516 = pneg %p210
      %p517 = pneg %p207
      %p518 = pneg %p231
      %p519 = pneg %p228
      %p520 = pneg %p252
      %p521 = pneg %p249
      %p522 = pneg %p278
      %p523 = pneg %p275
      %p524 = scmp.lt.s32.totalorder %s27, 1
      %s525 = scalar_select %p524, %s27, 1
      %s526 = smul.addr %s525, 16
      %s527 = smul.addr %s526, 8
      %s528 = scalar_lea.vmem %s10, %s527
      %p529 = pneg %p304
      %p530 = pneg %p301
      %p531 = scmp.lt.s32.totalorder %s27, 1
      %s532 = scalar_select %p531, %s27, 1
      %s533 = smul.addr %s532, 16
      %s534 = smul.addr %s533, 8
      %s535 = scalar_lea.vmem %s11, %s534
      %p536 = pneg %p330
      %p537 = pneg %p327
      %p538 = scmp.lt.s32.totalorder %s27, 1
      %s539 = scalar_select %p538, %s27, 1
      %s540 = scalar_lea.vmem %s12, %s539
      %p541 = pneg %p356
      %p542 = pneg %p353
      %p543 = scmp.lt.s32.totalorder %s27, 1
      %s544 = scalar_select %p543, %s27, 1
      %s545 = scalar_lea.vmem %s13, %s544
      %p546 = pneg %p382
      %p547 = pneg %p379
      %p548 = scmp.lt.s32.totalorder %s27, 1
      %s549 = scalar_select %p548, %s27, 1
      %s550 = smul.addr %s549, 32
      %s551 = smul.addr %s550, 8
      %s552 = scalar_lea.vmem %s14, %s551
      %p553 = pneg %p408
      %p554 = pneg %p405
      %p555 = scmp.lt.s32.totalorder %s27, 1
      %s556 = scalar_select %p555, %s27, 1
      %s557 = smul.addr %s556, 32
      %s558 = smul.addr %s557, 8
      %s559 = scalar_lea.vmem %s15, %s558
      %p560 = scmp.lt.s32.totalorder %s27, 1
      %s561 = scalar_select %p560, %s27, 1
      %s562 = smul.addr %s561, 16
      %s563 = smul.addr %s562, 4
      %s564 = scalar_lea.vmem %s0, %s563
      %p565 = scmp.lt.s32.totalorder %s27, 1
      %s566 = scalar_select %p565, %s27, 1
      %s567 = smul.addr %s566, 16
      %s568 = smul.addr %s567, 4
      %s569 = scalar_lea.vmem %s1, %s568
      %p570 = scmp.lt.s32.totalorder %s27, 1
      %s571 = scalar_select %p570, %s27, 1
      %s572 = smul.addr %s571, 16
      %s573 = smul.addr %s572, 8
      %s574 = scalar_lea.vmem %s6, %s573
      %p575 = scmp.lt.s32.totalorder %s27, 1
      %s576 = scalar_select %p575, %s27, 1
      %s577 = smul.addr %s576, 4
      %s578 = scalar_lea.vmem %s7, %s577
      %p579 = scmp.lt.s32.totalorder %s27, 1
      %s580 = scalar_select %p579, %s27, 1
      %s581 = smul.addr %s580, 16
      %s582 = smul.addr %s581, 8
      %s583 = scalar_lea.vmem %s10, %s582
      %p584 = scmp.lt.s32.totalorder %s27, 1
      %s585 = scalar_select %p584, %s27, 1
      %s586 = smul.addr %s585, 16
      %s587 = smul.addr %s586, 8
      %s588 = scalar_lea.vmem %s11, %s587
      %p589 = scmp.lt.s32.totalorder %s27, 1
      %s590 = scalar_select %p589, %s27, 1
      %s591 = scalar_lea.vmem %s12, %s590
      %p592 = scmp.lt.s32.totalorder %s27, 1
      %s593 = scalar_select %p592, %s27, 1
      %s594 = scalar_lea.vmem %s13, %s593
      %p595 = scmp.lt.s32.totalorder %s27, 1
      %s596 = scalar_select %p595, %s27, 1
      %s597 = smul.addr %s596, 32
      %s598 = smul.addr %s597, 8
      %s599 = scalar_lea.vmem %s14, %s598
      %p600 = scmp.lt.s32.totalorder %s27, 1
      %s601 = scalar_select %p600, %s27, 1
      %s602 = smul.addr %s601, 32
      %s603 = smul.addr %s602, 8
      %s604 = scalar_lea.vmem %s15, %s603
      %v607 = vld [vmem:[%s564] sm:$0xf]
      %v608 = vld [vmem:[%s564 + $0x4] sm:$0xf]
      %v609 = vld [vmem:[%s564 + $0x8] sm:$0xf]
      %v610 = vld [vmem:[%s564 + $0xc] sm:$0xf]
      %v611 = vld [vmem:[%s564 + $0x10] sm:$0xf]
      %v612 = vld [vmem:[%s564 + $0x14] sm:$0xf]
      %v613 = vld [vmem:[%s564 + $0x18] sm:$0xf]
      %v614 = vld [vmem:[%s564 + $0x1c] sm:$0xf]
      %v615 = vld [vmem:[%s564 + $0x20] sm:$0xf]
      %v616 = vld [vmem:[%s564 + $0x24] sm:$0xf]
      %v617 = vld [vmem:[%s564 + $0x28] sm:$0xf]
      %v618 = vld [vmem:[%s564 + $0x2c] sm:$0xf]
      %v619 = vld [vmem:[%s564 + $0x30] sm:$0xf]
      %v620 = vld [vmem:[%s564 + $0x34] sm:$0xf]
      %v621 = vld [vmem:[%s564 + $0x38] sm:$0xf]
      %v622 = vld [vmem:[%s564 + $0x3c] sm:$0xf]
      %v623 = vld [vmem:[%s569] sm:$0xf]
      %v624 = vld [vmem:[%s569 + $0x4] sm:$0xf]
      %v625 = vld [vmem:[%s569 + $0x8] sm:$0xf]
      %v626 = vld [vmem:[%s569 + $0xc] sm:$0xf]
      %v627 = vld [vmem:[%s569 + $0x10] sm:$0xf]
      %v628 = vld [vmem:[%s569 + $0x14] sm:$0xf]
      %v629 = vld [vmem:[%s569 + $0x18] sm:$0xf]
      %v630 = vld [vmem:[%s569 + $0x1c] sm:$0xf]
      %v631 = vld [vmem:[%s569 + $0x20] sm:$0xf]
      %v632 = vld [vmem:[%s569 + $0x24] sm:$0xf]
      %v633 = vld [vmem:[%s569 + $0x28] sm:$0xf]
      %v634 = vld [vmem:[%s569 + $0x2c] sm:$0xf]
      %v635 = vld [vmem:[%s569 + $0x30] sm:$0xf]
      %v636 = vld [vmem:[%s569 + $0x34] sm:$0xf]
      %v637 = vld [vmem:[%s569 + $0x38] sm:$0xf]
      %v638 = vld [vmem:[%s569 + $0x3c] sm:$0xf]
      %v639 = vld [vmem:[%s2] sm:$0xf]
      %v640 = vld [vmem:[%s2 + $0x4] sm:$0xf]
      %v641 = vld [vmem:[%s2 + $0x8] sm:$0xf]
      %v642 = vld [vmem:[%s2 + $0xc] sm:$0xf]
      %v643 = vld [vmem:[%s3] sm:$0x1]
      %v645 = vlaneseq
      %v646 = vshrl.u32 %v645, 7
      %v647 = vsub.s32 0, %v646
      %v648 = vrot.slane %v643, %v647
      %v666 = vunpack.c.l.b16 %v607
      %v667 = vunpack.c.l.b16 %v608
      %v668 = vunpack.c.l.b16 %v609
      %v669 = vunpack.c.l.b16 %v610
      %v670 = vunpack.c.l.b16 %v611
      %v671 = vunpack.c.l.b16 %v612
      %v672 = vunpack.c.l.b16 %v613
      %v673 = vunpack.c.l.b16 %v614
      %v674 = vunpack.c.l.b16 %v615
      %v675 = vunpack.c.l.b16 %v616
      %v676 = vunpack.c.l.b16 %v617
      %v677 = vunpack.c.l.b16 %v618
      %v678 = vunpack.c.l.b16 %v619
      %v679 = vunpack.c.l.b16 %v620
      %v680 = vunpack.c.l.b16 %v621
      %v681 = vunpack.c.l.b16 %v622
      %v682 = vpack.c.b16 %v667, %v666
      %v683 = vpack.c.b16 %v669, %v668
      %v684 = vpack.c.b16 %v671, %v670
      %v685 = vpack.c.b16 %v673, %v672
      %v686 = vpack.c.b16 %v675, %v674
      %v687 = vpack.c.b16 %v677, %v676
      %v688 = vpack.c.b16 %v679, %v678
      %v689 = vpack.c.b16 %v681, %v680
      %v694 = vunpack.c.l.b16 %v639
      %v695 = vunpack.c.l.b16 %v640
      %v696 = vunpack.c.l.b16 %v641
      %v697 = vunpack.c.l.b16 %v642
      %v698 = vpack.c.b16 %v695, %v694
      %v699 = vpack.c.b16 %v697, %v696
      %vm702 = vcmask 261120
      %v704 = vsel %vm702, %v682, 0
      %v707 = vsel %vm702, %v683, 0
      %v710 = vsel %vm702, %v684, 0
      %v713 = vsel %vm702, %v685, 0
      %v716 = vsel %vm702, %v686, 0
      %v719 = vsel %vm702, %v687, 0
      %v722 = vsel %vm702, %v688, 0
      %v725 = vsel %vm702, %v689, 0
      %727 = vmatprep.subr.bf16.mxu0 0
      %728 = vmatpush1.bf16.msra.mxu0 %v698
      %729 = vmatprep.subr.bf16.mxu0 0
      %730 = vmatpush1.bf16.msra.mxu0 %v699
      %731 = vmatprep.subr.bf16.mxu0 0
      %732 = vmatpush1.bf16.msra.mxu0 0
      %733 = vmatprep.subr.bf16.mxu0 0
      %734 = vmatpush1.bf16.msra.mxu0 0
      %735 = vmatprep.subr.bf16.mxu0 0
      %736 = vmatpush1.bf16.msra.mxu0 0
      %737 = vmatprep.subr.bf16.mxu0 0
      %738 = vmatpush1.bf16.msra.mxu0 0
      %739 = vmatprep.subr.bf16.mxu0 0
      %740 = vmatpush1.bf16.msra.mxu0 0
      %741 = vmatprep.subr.bf16.mxu0 0
      %742 = vmatpush1.bf16.msra.mxu0 0
      %743 = vmatprep.subr.bf16.mxu0 0
      %744 = vmatpush1.bf16.msra.mxu0 0
      %745 = vmatprep.subr.bf16.mxu0 0
      %746 = vmatpush1.bf16.msra.mxu0 0
      %747 = vmatprep.subr.bf16.mxu0 0
      %748 = vmatpush1.bf16.msra.mxu0 0
      %749 = vmatprep.subr.bf16.mxu0 0
      %750 = vmatpush1.bf16.msra.mxu0 0
      %751 = vmatprep.subr.bf16.mxu0 0
      %752 = vmatpush1.bf16.msra.mxu0 0
      %753 = vmatprep.subr.bf16.mxu0 0
      %754 = vmatpush1.bf16.msra.mxu0 0
      %755 = vmatprep.subr.bf16.mxu0 0
      %756 = vmatpush1.bf16.msra.mxu0 0
      %757 = vmatprep.subr.bf16.mxu0 0
      %758 = vmatpush1.bf16.msra.mxu0 0
      %759 = vmatprep.mubr.bf16.mxu0 0
      %760 = vmatmul.mubr.bf16.gmra.mrb[0].mxu0 %v704
      %v761 = vpop.f32.mrb[0].mxu0
      %v762 = vadd.f32 %v648, %v761
      %v763 = vpop.f32.mrb[0].mxu0
      %v764 = vpop.f32.mrb[0].mxu0
      %v765 = vadd.f32 %v648, %v764
      %v766 = vpop.f32.mrb[0].mxu0
      %767 = vmatprep.mubr.bf16.mxu0 0
      %768 = vmatmul.mubr.bf16.gmra.mrb[0].mxu0 %v707
      %v769 = vpop.f32.mrb[0].mxu0
      %v770 = vadd.f32 %v648, %v769
      %v771 = vpop.f32.mrb[0].mxu0
      %v772 = vpop.f32.mrb[0].mxu0
      %v773 = vadd.f32 %v648, %v772
      %v774 = vpop.f32.mrb[0].mxu0
      %775 = vmatprep.mubr.bf16.mxu0 0
      %776 = vmatmul.mubr.bf16.gmra.mrb[0].mxu0 %v710
      %v777 = vpop.f32.mrb[0].mxu0
      %v778 = vadd.f32 %v648, %v777
      %v779 = vpop.f32.mrb[0].mxu0
      %v780 = vpop.f32.mrb[0].mxu0
      %v781 = vadd.f32 %v648, %v780
      %v782 = vpop.f32.mrb[0].mxu0
      %783 = vmatprep.mubr.bf16.mxu0 0
      %784 = vmatmul.mubr.bf16.gmra.mrb[0].mxu0 %v713
      %v785 = vpop.f32.mrb[0].mxu0
      %v786 = vadd.f32 %v648, %v785
      %v787 = vpop.f32.mrb[0].mxu0
      %v788 = vpop.f32.mrb[0].mxu0
      %v789 = vadd.f32 %v648, %v788
      %v790 = vpop.f32.mrb[0].mxu0
      %791 = vmatprep.mubr.bf16.mxu0 0
      %792 = vmatmul.mubr.bf16.gmra.mrb[0].mxu0 %v716
      %v793 = vpop.f32.mrb[0].mxu0
      %v794 = vadd.f32 %v648, %v793
      %v795 = vpop.f32.mrb[0].mxu0
      %v796 = vpop.f32.mrb[0].mxu0
      %v797 = vadd.f32 %v648, %v796
      %v798 = vpop.f32.mrb[0].mxu0
      %799 = vmatprep.mubr.bf16.mxu0 0
      %800 = vmatmul.mubr.bf16.gmra.mrb[0].mxu0 %v719
      %v801 = vpop.f32.mrb[0].mxu0
      %v802 = vadd.f32 %v648, %v801
      %v803 = vpop.f32.mrb[0].mxu0
      %v804 = vpop.f32.mrb[0].mxu0
      %v805 = vadd.f32 %v648, %v804
      %v806 = vpop.f32.mrb[0].mxu0
      %807 = vmatprep.mubr.bf16.mxu0 0
      %808 = vmatmul.mubr.bf16.gmra.mrb[0].mxu0 %v722
      %v809 = vpop.f32.mrb[0].mxu0
      %v810 = vadd.f32 %v648, %v809
      %v811 = vpop.f32.mrb[0].mxu0
      %v812 = vpop.f32.mrb[0].mxu0
      %v813 = vadd.f32 %v648, %v812
      %v814 = vpop.f32.mrb[0].mxu0
      %815 = vmatprep.mubr.bf16.mxu0 0
      %816 = vmatmul.mubr.bf16.gmra.mrb[0].mxu0 %v725
      %v817 = vpop.f32.mrb[0].mxu0
      %v818 = vadd.f32 %v648, %v817
      %v819 = vpop.f32.mrb[0].mxu0
      %v820 = vpop.f32.mrb[0].mxu0
      %v821 = vadd.f32 %v648, %v820
      %v822 = vpop.f32.mrb[0].mxu0
      %823 = vdwg.mxu0
      %824 = vst [vmem:[%s583] sm:$0xff] %v762
      %825 = vst [vmem:[%s583 + $0x8] sm:$0xff] %v765
      %826 = vst [vmem:[%s583 + $0x10] sm:$0xff] %v770
      %827 = vst [vmem:[%s583 + $0x18] sm:$0xff] %v773
      %828 = vst [vmem:[%s583 + $0x20] sm:$0xff] %v778
      %829 = vst [vmem:[%s583 + $0x28] sm:$0xff] %v781
      %830 = vst [vmem:[%s583 + $0x30] sm:$0xff] %v786
      %831 = vst [vmem:[%s583 + $0x38] sm:$0xff] %v789
      %832 = vst [vmem:[%s583 + $0x40] sm:$0xff] %v794
      %833 = vst [vmem:[%s583 + $0x48] sm:$0xff] %v797
      %834 = vst [vmem:[%s583 + $0x50] sm:$0xff] %v802
      %835 = vst [vmem:[%s583 + $0x58] sm:$0xff] %v805
      %836 = vst [vmem:[%s583 + $0x60] sm:$0xff] %v810
      %837 = vst [vmem:[%s583 + $0x68] sm:$0xff] %v813
      %838 = vst [vmem:[%s583 + $0x70] sm:$0xff] %v818
      %839 = vst [vmem:[%s583 + $0x78] sm:$0xff] %v821
      %v840 = vld [vmem:[%s4] sm:$0xf]
      %v841 = vld [vmem:[%s4 + $0x4] sm:$0xf]
      %v842 = vld [vmem:[%s4 + $0x8] sm:$0xf]
      %v843 = vld [vmem:[%s4 + $0xc] sm:$0xf]
      %v844 = vld [vmem:[%s4 + $0x10] sm:$0xf]
      %v845 = vld [vmem:[%s4 + $0x14] sm:$0xf]
      %v846 = vld [vmem:[%s5] sm:$0x1]
      %v848 = vlaneseq
      %v849 = vshrl.u32 %v848, 7
      %v850 = vsub.s32 0, %v849
      %v851 = vrot.slane %v846, %v850
      %v869 = vunpack.c.l.b16 %v623
      %v870 = vunpack.c.l.b16 %v624
      %v871 = vunpack.c.l.b16 %v625
      %v872 = vunpack.c.l.b16 %v626
      %v873 = vunpack.c.l.b16 %v627
      %v874 = vunpack.c.l.b16 %v628
      %v875 = vunpack.c.l.b16 %v629
      %v876 = vunpack.c.l.b16 %v630
      %v877 = vunpack.c.l.b16 %v631
      %v878 = vunpack.c.l.b16 %v632
      %v879 = vunpack.c.l.b16 %v633
      %v880 = vunpack.c.l.b16 %v634
      %v881 = vunpack.c.l.b16 %v635
      %v882 = vunpack.c.l.b16 %v636
      %v883 = vunpack.c.l.b16 %v637
      %v884 = vunpack.c.l.b16 %v638
      %v885 = vpack.c.b16 %v870, %v869
      %v886 = vpack.c.b16 %v872, %v871
      %v887 = vpack.c.b16 %v874, %v873
      %v888 = vpack.c.b16 %v876, %v875
      %v889 = vpack.c.b16 %v878, %v877
      %v890 = vpack.c.b16 %v880, %v879
      %v891 = vpack.c.b16 %v882, %v881
      %v892 = vpack.c.b16 %v884, %v883
      %v899 = vunpack.c.l.b16 %v840
      %v900 = vunpack.c.l.b16 %v841
      %v901 = vunpack.c.l.b16 %v842
      %v902 = vunpack.c.l.b16 %v843
      %v903 = vunpack.c.l.b16 %v844
      %v904 = vunpack.c.l.b16 %v845
      %v905 = vpack.c.b16 %v900, %v899
      %v906 = vpack.c.b16 %v902, %v901
      %v907 = vpack.c.b16 %v904, %v903
      %vm911 = vcmask 392192
      %v913 = vsel %vm911, %v885, 0
      %v916 = vsel %vm911, %v886, 0
      %v919 = vsel %vm911, %v887, 0
      %v922 = vsel %vm911, %v888, 0
      %v925 = vsel %vm911, %v889, 0
      %v928 = vsel %vm911, %v890, 0
      %v931 = vsel %vm911, %v891, 0
      %v934 = vsel %vm911, %v892, 0
      %936 = vmatprep.subr.bf16.mxu0 0
      %937 = vmatpush1.bf16.msra.mxu0 %v905
      %938 = vmatprep.subr.bf16.mxu0 0
      %939 = vmatpush1.bf16.msra.mxu0 %v906
      %940 = vmatprep.subr.bf16.mxu0 0
      %941 = vmatpush1.bf16.msra.mxu0 %v907
      %942 = vmatprep.subr.bf16.mxu0 0
      %943 = vmatpush1.bf16.msra.mxu0 0
      %944 = vmatprep.subr.bf16.mxu0 0
      %945 = vmatpush1.bf16.msra.mxu0 0
      %946 = vmatprep.subr.bf16.mxu0 0
      %947 = vmatpush1.bf16.msra.mxu0 0
      %948 = vmatprep.subr.bf16.mxu0 0
      %949 = vmatpush1.bf16.msra.mxu0 0
      %950 = vmatprep.subr.bf16.mxu0 0
      %951 = vmatpush1.bf16.msra.mxu0 0
      %952 = vmatprep.subr.bf16.mxu0 0
      %953 = vmatpush1.bf16.msra.mxu0 0
      %954 = vmatprep.subr.bf16.mxu0 0
      %955 = vmatpush1.bf16.msra.mxu0 0
      %956 = vmatprep.subr.bf16.mxu0 0
      %957 = vmatpush1.bf16.msra.mxu0 0
      %958 = vmatprep.subr.bf16.mxu0 0
      %959 = vmatpush1.bf16.msra.mxu0 0
      %960 = vmatprep.subr.bf16.mxu0 0
      %961 = vmatpush1.bf16.msra.mxu0 0
      %962 = vmatprep.subr.bf16.mxu0 0
      %963 = vmatpush1.bf16.msra.mxu0 0
      %964 = vmatprep.subr.bf16.mxu0 0
      %965 = vmatpush1.bf16.msra.mxu0 0
      %966 = vmatprep.subr.bf16.mxu0 0
      %967 = vmatpush1.bf16.msra.mxu0 0
      %968 = vmatprep.mubr.bf16.mxu0 0
      %969 = vmatmul.mubr.bf16.gmra.mrb[0].mxu0 %v913
      %v970 = vpop.f32.mrb[0].mxu0
      %v971 = vadd.f32 %v851, %v970
      %v972 = vpop.f32.mrb[0].mxu0
      %v973 = vpop.f32.mrb[0].mxu0
      %v974 = vadd.f32 %v851, %v973
      %v975 = vpop.f32.mrb[0].mxu0
      %976 = vmatprep.mubr.bf16.mxu0 0
      %977 = vmatmul.mubr.bf16.gmra.mrb[0].mxu0 %v916
      %v978 = vpop.f32.mrb[0].mxu0
      %v979 = vadd.f32 %v851, %v978
      %v980 = vpop.f32.mrb[0].mxu0
      %v981 = vpop.f32.mrb[0].mxu0
      %v982 = vadd.f32 %v851, %v981
      %v983 = vpop.f32.mrb[0].mxu0
      %984 = vmatprep.mubr.bf16.mxu0 0
      %985 = vmatmul.mubr.bf16.gmra.mrb[0].mxu0 %v919
      %v986 = vpop.f32.mrb[0].mxu0
      %v987 = vadd.f32 %v851, %v986
      %v988 = vpop.f32.mrb[0].mxu0
      %v989 = vpop.f32.mrb[0].mxu0
      %v990 = vadd.f32 %v851, %v989
      %v991 = vpop.f32.mrb[0].mxu0
      %992 = vmatprep.mubr.bf16.mxu0 0
      %993 = vmatmul.mubr.bf16.gmra.mrb[0].mxu0 %v922
      %v994 = vpop.f32.mrb[0].mxu0
      %v995 = vadd.f32 %v851, %v994
      %v996 = vpop.f32.mrb[0].mxu0
      %v997 = vpop.f32.mrb[0].mxu0
      %v998 = vadd.f32 %v851, %v997
      %v999 = vpop.f32.mrb[0].mxu0
      %1000 = vmatprep.mubr.bf16.mxu0 0
      %1001 = vmatmul.mubr.bf16.gmra.mrb[0].mxu0 %v925
      %v1002 = vpop.f32.mrb[0].mxu0
      %v1003 = vadd.f32 %v851, %v1002
      %v1004 = vpop.f32.mrb[0].mxu0
      %v1005 = vpop.f32.mrb[0].mxu0
      %v1006 = vadd.f32 %v851, %v1005
      %v1007 = vpop.f32.mrb[0].mxu0
      %1008 = vmatprep.mubr.bf16.mxu0 0
      %1009 = vmatmul.mubr.bf16.gmra.mrb[0].mxu0 %v928
      %v1010 = vpop.f32.mrb[0].mxu0
      %v1011 = vadd.f32 %v851, %v1010
      %v1012 = vpop.f32.mrb[0].mxu0
      %v1013 = vpop.f32.mrb[0].mxu0
      %v1014 = vadd.f32 %v851, %v1013
      %v1015 = vpop.f32.mrb[0].mxu0
      %1016 = vmatprep.mubr.bf16.mxu0 0
      %1017 = vmatmul.mubr.bf16.gmra.mrb[0].mxu0 %v931
      %v1018 = vpop.f32.mrb[0].mxu0
      %v1019 = vadd.f32 %v851, %v1018
      %v1020 = vpop.f32.mrb[0].mxu0
      %v1021 = vpop.f32.mrb[0].mxu0
      %v1022 = vadd.f32 %v851, %v1021
      %v1023 = vpop.f32.mrb[0].mxu0
      %1024 = vmatprep.mubr.bf16.mxu0 0
      %1025 = vmatmul.mubr.bf16.gmra.mrb[0].mxu0 %v934
      %v1026 = vpop.f32.mrb[0].mxu0
      %v1027 = vadd.f32 %v851, %v1026
      %v1028 = vpop.f32.mrb[0].mxu0
      %v1029 = vpop.f32.mrb[0].mxu0
      %v1030 = vadd.f32 %v851, %v1029
      %v1031 = vpop.f32.mrb[0].mxu0
      %1032 = vdwg.mxu0
      %1033 = vst [vmem:[%s588] sm:$0xff] %v971
      %1034 = vst [vmem:[%s588 + $0x8] sm:$0xff] %v974
      %1035 = vst [vmem:[%s588 + $0x10] sm:$0xff] %v979
      %1036 = vst [vmem:[%s588 + $0x18] sm:$0xff] %v982
      %1037 = vst [vmem:[%s588 + $0x20] sm:$0xff] %v987
      %1038 = vst [vmem:[%s588 + $0x28] sm:$0xff] %v990
      %1039 = vst [vmem:[%s588 + $0x30] sm:$0xff] %v995
      %1040 = vst [vmem:[%s588 + $0x38] sm:$0xff] %v998
      %1041 = vst [vmem:[%s588 + $0x40] sm:$0xff] %v1003
      %1042 = vst [vmem:[%s588 + $0x48] sm:$0xff] %v1006
      %1043 = vst [vmem:[%s588 + $0x50] sm:$0xff] %v1011
      %1044 = vst [vmem:[%s588 + $0x58] sm:$0xff] %v1014
      %1045 = vst [vmem:[%s588 + $0x60] sm:$0xff] %v1019
      %1046 = vst [vmem:[%s588 + $0x68] sm:$0xff] %v1022
      %1047 = vst [vmem:[%s588 + $0x70] sm:$0xff] %v1027
      %1048 = vst [vmem:[%s588 + $0x78] sm:$0xff] %v1030
      %v1050 = vsel %vm702, 1065369472, 0
      %1052 = vmatprep.subr.bf16.mxu0 0
      %1053 = vmatpush1.bf16.xpose.msra.mxu0 %v704
      %1054 = vmatprep.subr.bf16.mxu0 0
      %1055 = vmatpush1.bf16.xpose.msra.mxu0 %v707
      %1056 = vmatprep.subr.bf16.mxu0 0
      %1057 = vmatpush1.bf16.xpose.msra.mxu0 %v710
      %1058 = vmatprep.subr.bf16.mxu0 0
      %1059 = vmatpush1.bf16.xpose.msra.mxu0 %v713
      %1060 = vmatprep.subr.bf16.mxu0 0
      %1061 = vmatpush1.bf16.xpose.msra.mxu0 %v716
      %1062 = vmatprep.subr.bf16.mxu0 0
      %1063 = vmatpush1.bf16.xpose.msra.mxu0 %v719
      %1064 = vmatprep.subr.bf16.mxu0 0
      %1065 = vmatpush1.bf16.xpose.msra.mxu0 %v722
      %1066 = vmatprep.subr.bf16.mxu0 0
      %1067 = vmatpush1.bf16.xpose.msra.mxu0 %v725
      %1068 = vmatprep.subr.bf16.mxu0 0
      %1069 = vmatpush1.bf16.xpose.msra.mxu0 0
      %1070 = vmatprep.subr.bf16.mxu0 0
      %1071 = vmatpush1.bf16.xpose.msra.mxu0 0
      %1072 = vmatprep.subr.bf16.mxu0 0
      %1073 = vmatpush1.bf16.xpose.msra.mxu0 0
      %1074 = vmatprep.subr.bf16.mxu0 0
      %1075 = vmatpush1.bf16.xpose.msra.mxu0 0
      %1076 = vmatprep.subr.bf16.mxu0 0
      %1077 = vmatpush1.bf16.xpose.msra.mxu0 0
      %1078 = vmatprep.subr.bf16.mxu0 0
      %1079 = vmatpush1.bf16.xpose.msra.mxu0 0
      %1080 = vmatprep.subr.bf16.mxu0 0
      %1081 = vmatpush1.bf16.xpose.msra.mxu0 0
      %1082 = vmatprep.subr.bf16.mxu0 0
      %1083 = vmatpush1.bf16.xpose.msra.mxu0 0
      %1084 = vmatprep.mubr.bf16.mxu0 0
      %1085 = vmatmul.mubr.bf16.gmra.mrb[0].mxu0 %v1050
      %v1086 = vpop.f32.mrb[0].mxu0
      %v1087 = vadd.f32 0.0, %v1086
      %v1088 = vpop.f32.mrb[0].mxu0
      %v1089 = vpop.f32.mrb[0].mxu0
      %v1090 = vpop.f32.mrb[0].mxu0
      %1091 = vdwg.mxu0
      %v1092 = vsel %vm911, 1065369472, 0
      %1094 = vmatprep.subr.bf16.mxu0 0
      %1095 = vmatpush1.bf16.xpose.msra.mxu0 %v913
      %1096 = vmatprep.subr.bf16.mxu0 0
      %1097 = vmatpush1.bf16.xpose.msra.mxu0 %v916
      %1098 = vmatprep.subr.bf16.mxu0 0
      %1099 = vmatpush1.bf16.xpose.msra.mxu0 %v919
      %1100 = vmatprep.subr.bf16.mxu0 0
      %1101 = vmatpush1.bf16.xpose.msra.mxu0 %v922
      %1102 = vmatprep.subr.bf16.mxu0 0
      %1103 = vmatpush1.bf16.xpose.msra.mxu0 %v925
      %1104 = vmatprep.subr.bf16.mxu0 0
      %1105 = vmatpush1.bf16.xpose.msra.mxu0 %v928
      %1106 = vmatprep.subr.bf16.mxu0 0
      %1107 = vmatpush1.bf16.xpose.msra.mxu0 %v931
      %1108 = vmatprep.subr.bf16.mxu0 0
      %1109 = vmatpush1.bf16.xpose.msra.mxu0 %v934
      %1110 = vmatprep.subr.bf16.mxu0 0
      %1111 = vmatpush1.bf16.xpose.msra.mxu0 0
      %1112 = vmatprep.subr.bf16.mxu0 0
      %1113 = vmatpush1.bf16.xpose.msra.mxu0 0
      %1114 = vmatprep.subr.bf16.mxu0 0
      %1115 = vmatpush1.bf16.xpose.msra.mxu0 0
      %1116 = vmatprep.subr.bf16.mxu0 0
      %1117 = vmatpush1.bf16.xpose.msra.mxu0 0
      %1118 = vmatprep.subr.bf16.mxu0 0
      %1119 = vmatpush1.bf16.xpose.msra.mxu0 0
      %1120 = vmatprep.subr.bf16.mxu0 0
      %1121 = vmatpush1.bf16.xpose.msra.mxu0 0
      %1122 = vmatprep.subr.bf16.mxu0 0
      %1123 = vmatpush1.bf16.xpose.msra.mxu0 0
      %1124 = vmatprep.subr.bf16.mxu0 0
      %1125 = vmatpush1.bf16.xpose.msra.mxu0 0
      %1126 = vmatprep.mubr.bf16.mxu0 0
      %1127 = vmatmul.mubr.bf16.gmra.mrb[0].mxu0 %v1092
      %v1128 = vpop.f32.mrb[0].mxu0
      %v1129 = vadd.f32 0.0, %v1128
      %v1130 = vpop.f32.mrb[0].mxu0
      %v1131 = vpop.f32.mrb[0].mxu0
      %v1132 = vpop.f32.mrb[0].mxu0
      %1133 = vdwg.mxu0
      %vm1134 = vcmp.eq.f32.partialorder %v1087, 0.0
      %v1135 = vsel %vm1134, -100000.0, 0.0
      %vm1136 = vcmp.eq.f32.partialorder %v1129, 0.0
      %v1137 = vsel %vm1136, -100000.0, 0.0
      %1138 = vst [vmem:[%s591] sm:$0x1] %v1135
      %1139 = vst [vmem:[%s594] sm:$0x1] %v1137
      %v1140 = vld [vmem:[%s574] sm:$0xff]
      %v1141 = vld [vmem:[%s574 + $0x8] sm:$0xff]
      %v1142 = vld [vmem:[%s574 + $0x10] sm:$0xff]
      %v1143 = vld [vmem:[%s574 + $0x18] sm:$0xff]
      %v1144 = vld [vmem:[%s574 + $0x20] sm:$0xff]
      %v1145 = vld [vmem:[%s574 + $0x28] sm:$0xff]
      %v1146 = vld [vmem:[%s574 + $0x30] sm:$0xff]
      %v1147 = vld [vmem:[%s574 + $0x38] sm:$0xff]
      %v1148 = vld [vmem:[%s574 + $0x40] sm:$0xff]
      %v1149 = vld [vmem:[%s574 + $0x48] sm:$0xff]
      %v1150 = vld [vmem:[%s574 + $0x50] sm:$0xff]
      %v1151 = vld [vmem:[%s574 + $0x58] sm:$0xff]
      %v1152 = vld [vmem:[%s574 + $0x60] sm:$0xff]
      %v1153 = vld [vmem:[%s574 + $0x68] sm:$0xff]
      %v1154 = vld [vmem:[%s574 + $0x70] sm:$0xff]
      %v1155 = vld [vmem:[%s574 + $0x78] sm:$0xff]
      %v1156 = vld [vmem:[%s578] sm:$0xf]
      %v1157 = vld [vmem:[%s8] sm:$0xff]
      %v1158 = vld [vmem:[%s8 + $0x8] sm:$0xff]
      %v1159 = vld [vmem:[%s8 + $0x10] sm:$0xff]
      %v1160 = vld [vmem:[%s8 + $0x18] sm:$0xff]
      %v1161 = vld [vmem:[%s8 + $0x20] sm:$0xff]
      %v1162 = vld [vmem:[%s8 + $0x28] sm:$0xff]
      %v1163 = vld [vmem:[%s8 + $0x30] sm:$0xff]
      %v1164 = vld [vmem:[%s8 + $0x38] sm:$0xff]
      %v1165 = vld [vmem:[%s8 + $0x40] sm:$0xff]
      %v1166 = vld [vmem:[%s8 + $0x48] sm:$0xff]
      %v1167 = vld [vmem:[%s8 + $0x50] sm:$0xff]
      %v1168 = vld [vmem:[%s8 + $0x58] sm:$0xff]
      %v1169 = vld [vmem:[%s8 + $0x60] sm:$0xff]
      %v1170 = vld [vmem:[%s8 + $0x68] sm:$0xff]
      %v1171 = vld [vmem:[%s8 + $0x70] sm:$0xff]
      %v1172 = vld [vmem:[%s8 + $0x78] sm:$0xff]
      %v1173 = vld [vmem:[%s9] sm:$0xf]
      %1175 = vset.pattern.permute.xlu0 0
      %1176 = vperm.xlu0 %1175, %v1140
      %v1177 = vpop.permute.xlu0 %1176
      %1180 = vset.pattern.permute.xlu0 0
      %1181 = vperm.xlu0 %1180, %v1141
      %v1182 = vpop.permute.xlu0 %1181
      %1185 = vset.pattern.permute.xlu0 0
      %1186 = vperm.xlu0 %1185, %v1142
      %v1187 = vpop.permute.xlu0 %1186
      %1190 = vset.pattern.permute.xlu0 0
      %1191 = vperm.xlu0 %1190, %v1143
      %v1192 = vpop.permute.xlu0 %1191
      %1195 = vset.pattern.permute.xlu0 0
      %1196 = vperm.xlu0 %1195, %v1144
      %v1197 = vpop.permute.xlu0 %1196
      %1200 = vset.pattern.permute.xlu0 0
      %1201 = vperm.xlu0 %1200, %v1145
      %v1202 = vpop.permute.xlu0 %1201
      %1205 = vset.pattern.permute.xlu0 0
      %1206 = vperm.xlu0 %1205, %v1146
      %v1207 = vpop.permute.xlu0 %1206
      %1210 = vset.pattern.permute.xlu0 0
      %1211 = vperm.xlu0 %1210, %v1147
      %v1212 = vpop.permute.xlu0 %1211
      %1215 = vset.pattern.permute.xlu0 0
      %1216 = vperm.xlu0 %1215, %v1148
      %v1217 = vpop.permute.xlu0 %1216
      %1220 = vset.pattern.permute.xlu0 0
      %1221 = vperm.xlu0 %1220, %v1149
      %v1222 = vpop.permute.xlu0 %1221
      %1225 = vset.pattern.permute.xlu0 0
      %1226 = vperm.xlu0 %1225, %v1150
      %v1227 = vpop.permute.xlu0 %1226
      %1230 = vset.pattern.permute.xlu0 0
      %1231 = vperm.xlu0 %1230, %v1151
      %v1232 = vpop.permute.xlu0 %1231
      %1235 = vset.pattern.permute.xlu0 0
      %1236 = vperm.xlu0 %1235, %v1152
      %v1237 = vpop.permute.xlu0 %1236
      %1240 = vset.pattern.permute.xlu0 0
      %1241 = vperm.xlu0 %1240, %v1153
      %v1242 = vpop.permute.xlu0 %1241
      %1245 = vset.pattern.permute.xlu0 0
      %1246 = vperm.xlu0 %1245, %v1154
      %v1247 = vpop.permute.xlu0 %1246
      %1250 = vset.pattern.permute.xlu0 0
      %1251 = vperm.xlu0 %1250, %v1155
      %v1252 = vpop.permute.xlu0 %1251
      %v1254 = vlaneseq
      %v1255 = vshrl.u32 %v1254, 7
      %v1256 = vsub.s32 2, %v1255
      %v1257 = vrot.slane %v1173, %v1256
      %vm1258 = vcmp.lt.f32.partialorder %v1177, %v1257
      %vm1259 = vcmp.lt.f32.partialorder %v1182, %v1257
      %vm1260 = vcmp.lt.f32.partialorder %v1187, %v1257
      %vm1261 = vcmp.lt.f32.partialorder %v1192, %v1257
      %vm1262 = vcmp.lt.f32.partialorder %v1197, %v1257
      %vm1263 = vcmp.lt.f32.partialorder %v1202, %v1257
      %vm1264 = vcmp.lt.f32.partialorder %v1207, %v1257
      %vm1265 = vcmp.lt.f32.partialorder %v1212, %v1257
      %vm1266 = vcmp.lt.f32.partialorder %v1217, %v1257
      %vm1267 = vcmp.lt.f32.partialorder %v1222, %v1257
      %vm1268 = vcmp.lt.f32.partialorder %v1227, %v1257
      %vm1269 = vcmp.lt.f32.partialorder %v1232, %v1257
      %vm1270 = vcmp.lt.f32.partialorder %v1237, %v1257
      %vm1271 = vcmp.lt.f32.partialorder %v1242, %v1257
      %vm1272 = vcmp.lt.f32.partialorder %v1247, %v1257
      %vm1273 = vcmp.lt.f32.partialorder %v1252, %v1257
      %1274 = vset.pattern.permute.xlu0 2
      %1275 = vperm.xlu0 %1274, %v1140
      %v1276 = vpop.permute.xlu0 %1275
      %1278 = vset.pattern.permute.xlu0 2
      %1279 = vperm.xlu0 %1278, %v1141
      %v1280 = vpop.permute.xlu0 %1279
      %1282 = vset.pattern.permute.xlu0 2
      %1283 = vperm.xlu0 %1282, %v1142
      %v1284 = vpop.permute.xlu0 %1283
      %1286 = vset.pattern.permute.xlu0 2
      %1287 = vperm.xlu0 %1286, %v1143
      %v1288 = vpop.permute.xlu0 %1287
      %1290 = vset.pattern.permute.xlu0 2
      %1291 = vperm.xlu0 %1290, %v1144
      %v1292 = vpop.permute.xlu0 %1291
      %1294 = vset.pattern.permute.xlu0 2
      %1295 = vperm.xlu0 %1294, %v1145
      %v1296 = vpop.permute.xlu0 %1295
      %1298 = vset.pattern.permute.xlu0 2
      %1299 = vperm.xlu0 %1298, %v1146
      %v1300 = vpop.permute.xlu0 %1299
      %1302 = vset.pattern.permute.xlu0 2
      %1303 = vperm.xlu0 %1302, %v1147
      %v1304 = vpop.permute.xlu0 %1303
      %1306 = vset.pattern.permute.xlu0 2
      %1307 = vperm.xlu0 %1306, %v1148
      %v1308 = vpop.permute.xlu0 %1307
      %1310 = vset.pattern.permute.xlu0 2
      %1311 = vperm.xlu0 %1310, %v1149
      %v1312 = vpop.permute.xlu0 %1311
      %1314 = vset.pattern.permute.xlu0 2
      %1315 = vperm.xlu0 %1314, %v1150
      %v1316 = vpop.permute.xlu0 %1315
      %1318 = vset.pattern.permute.xlu0 2
      %1319 = vperm.xlu0 %1318, %v1151
      %v1320 = vpop.permute.xlu0 %1319
      %1322 = vset.pattern.permute.xlu0 2
      %1323 = vperm.xlu0 %1322, %v1152
      %v1324 = vpop.permute.xlu0 %1323
      %1326 = vset.pattern.permute.xlu0 2
      %1327 = vperm.xlu0 %1326, %v1153
      %v1328 = vpop.permute.xlu0 %1327
      %1330 = vset.pattern.permute.xlu0 2
      %1331 = vperm.xlu0 %1330, %v1154
      %v1332 = vpop.permute.xlu0 %1331
      %1334 = vset.pattern.permute.xlu0 2
      %1335 = vperm.xlu0 %1334, %v1155
      %v1336 = vpop.permute.xlu0 %1335
      %v1338 = vlaneseq
      %v1339 = vshrl.u32 %v1338, 7
      %v1340 = vsub.s32 0, %v1339
      %v1341 = vrot.slane %v1173, %v1340
      %vm1342 = vcmp.gt.f32.partialorder %v1276, %v1341
      %vm1343 = vcmp.gt.f32.partialorder %v1280, %v1341
      %vm1344 = vcmp.gt.f32.partialorder %v1284, %v1341
      %vm1345 = vcmp.gt.f32.partialorder %v1288, %v1341
      %vm1346 = vcmp.gt.f32.partialorder %v1292, %v1341
      %vm1347 = vcmp.gt.f32.partialorder %v1296, %v1341
      %vm1348 = vcmp.gt.f32.partialorder %v1300, %v1341
      %vm1349 = vcmp.gt.f32.partialorder %v1304, %v1341
      %vm1350 = vcmp.gt.f32.partialorder %v1308, %v1341
      %vm1351 = vcmp.gt.f32.partialorder %v1312, %v1341
      %vm1352 = vcmp.gt.f32.partialorder %v1316, %v1341
      %vm1353 = vcmp.gt.f32.partialorder %v1320, %v1341
      %vm1354 = vcmp.gt.f32.partialorder %v1324, %v1341
      %vm1355 = vcmp.gt.f32.partialorder %v1328, %v1341
      %vm1356 = vcmp.gt.f32.partialorder %v1332, %v1341
      %vm1357 = vcmp.gt.f32.partialorder %v1336, %v1341
      %vm1358 = vmand %vm1258, %vm1342
      %vm1359 = vmand %vm1259, %vm1343
      %vm1360 = vmand %vm1260, %vm1344
      %vm1361 = vmand %vm1261, %vm1345
      %vm1362 = vmand %vm1262, %vm1346
      %vm1363 = vmand %vm1263, %vm1347
      %vm1364 = vmand %vm1264, %vm1348
      %vm1365 = vmand %vm1265, %vm1349
      %vm1366 = vmand %vm1266, %vm1350
      %vm1367 = vmand %vm1267, %vm1351
      %vm1368 = vmand %vm1268, %vm1352
      %vm1369 = vmand %vm1269, %vm1353
      %vm1370 = vmand %vm1270, %vm1354
      %vm1371 = vmand %vm1271, %vm1355
      %vm1372 = vmand %vm1272, %vm1356
      %vm1373 = vmand %vm1273, %vm1357
      %1374 = vset.pattern.permute.xlu0 1
      %1375 = vperm.xlu0 %1374, %v1140
      %v1376 = vpop.permute.xlu0 %1375
      %1378 = vset.pattern.permute.xlu0 1
      %1379 = vperm.xlu0 %1378, %v1141
      %v1380 = vpop.permute.xlu0 %1379
      %1382 = vset.pattern.permute.xlu0 1
      %1383 = vperm.xlu0 %1382, %v1142
      %v1384 = vpop.permute.xlu0 %1383
      %1386 = vset.pattern.permute.xlu0 1
      %1387 = vperm.xlu0 %1386, %v1143
      %v1388 = vpop.permute.xlu0 %1387
      %1390 = vset.pattern.permute.xlu0 1
      %1391 = vperm.xlu0 %1390, %v1144
      %v1392 = vpop.permute.xlu0 %1391
      %1394 = vset.pattern.permute.xlu0 1
      %1395 = vperm.xlu0 %1394, %v1145
      %v1396 = vpop.permute.xlu0 %1395
      %1398 = vset.pattern.permute.xlu0 1
      %1399 = vperm.xlu0 %1398, %v1146
      %v1400 = vpop.permute.xlu0 %1399
      %1402 = vset.pattern.permute.xlu0 1
      %1403 = vperm.xlu0 %1402, %v1147
      %v1404 = vpop.permute.xlu0 %1403
      %1406 = vset.pattern.permute.xlu0 1
      %1407 = vperm.xlu0 %1406, %v1148
      %v1408 = vpop.permute.xlu0 %1407
      %1410 = vset.pattern.permute.xlu0 1
      %1411 = vperm.xlu0 %1410, %v1149
      %v1412 = vpop.permute.xlu0 %1411
      %1414 = vset.pattern.permute.xlu0 1
      %1415 = vperm.xlu0 %1414, %v1150
      %v1416 = vpop.permute.xlu0 %1415
      %1418 = vset.pattern.permute.xlu0 1
      %1419 = vperm.xlu0 %1418, %v1151
      %v1420 = vpop.permute.xlu0 %1419
      %1422 = vset.pattern.permute.xlu0 1
      %1423 = vperm.xlu0 %1422, %v1152
      %v1424 = vpop.permute.xlu0 %1423
      %1426 = vset.pattern.permute.xlu0 1
      %1427 = vperm.xlu0 %1426, %v1153
      %v1428 = vpop.permute.xlu0 %1427
      %1430 = vset.pattern.permute.xlu0 1
      %1431 = vperm.xlu0 %1430, %v1154
      %v1432 = vpop.permute.xlu0 %1431
      %1434 = vset.pattern.permute.xlu0 1
      %1435 = vperm.xlu0 %1434, %v1155
      %v1436 = vpop.permute.xlu0 %1435
      %v1438 = vlaneseq
      %v1439 = vshrl.u32 %v1438, 7
      %v1440 = vsub.s32 3, %v1439
      %v1441 = vrot.slane %v1173, %v1440
      %vm1442 = vcmp.lt.f32.partialorder %v1376, %v1441
      %vm1443 = vcmp.lt.f32.partialorder %v1380, %v1441
      %vm1444 = vcmp.lt.f32.partialorder %v1384, %v1441
      %vm1445 = vcmp.lt.f32.partialorder %v1388, %v1441
      %vm1446 = vcmp.lt.f32.partialorder %v1392, %v1441
      %vm1447 = vcmp.lt.f32.partialorder %v1396, %v1441
      %vm1448 = vcmp.lt.f32.partialorder %v1400, %v1441
      %vm1449 = vcmp.lt.f32.partialorder %v1404, %v1441
      %vm1450 = vcmp.lt.f32.partialorder %v1408, %v1441
      %vm1451 = vcmp.lt.f32.partialorder %v1412, %v1441
      %vm1452 = vcmp.lt.f32.partialorder %v1416, %v1441
      %vm1453 = vcmp.lt.f32.partialorder %v1420, %v1441
      %vm1454 = vcmp.lt.f32.partialorder %v1424, %v1441
      %vm1455 = vcmp.lt.f32.partialorder %v1428, %v1441
      %vm1456 = vcmp.lt.f32.partialorder %v1432, %v1441
      %vm1457 = vcmp.lt.f32.partialorder %v1436, %v1441
      %vm1458 = vmand %vm1358, %vm1442
      %vm1459 = vmand %vm1359, %vm1443
      %vm1460 = vmand %vm1360, %vm1444
      %vm1461 = vmand %vm1361, %vm1445
      %vm1462 = vmand %vm1362, %vm1446
      %vm1463 = vmand %vm1363, %vm1447
      %vm1464 = vmand %vm1364, %vm1448
      %vm1465 = vmand %vm1365, %vm1449
      %vm1466 = vmand %vm1366, %vm1450
      %vm1467 = vmand %vm1367, %vm1451
      %vm1468 = vmand %vm1368, %vm1452
      %vm1469 = vmand %vm1369, %vm1453
      %vm1470 = vmand %vm1370, %vm1454
      %vm1471 = vmand %vm1371, %vm1455
      %vm1472 = vmand %vm1372, %vm1456
      %vm1473 = vmand %vm1373, %vm1457
      %1474 = vset.pattern.permute.xlu0 3
      %1475 = vperm.xlu0 %1474, %v1140
      %v1476 = vpop.permute.xlu0 %1475
      %1478 = vset.pattern.permute.xlu0 3
      %1479 = vperm.xlu0 %1478, %v1141
      %v1480 = vpop.permute.xlu0 %1479
      %1482 = vset.pattern.permute.xlu0 3
      %1483 = vperm.xlu0 %1482, %v1142
      %v1484 = vpop.permute.xlu0 %1483
      %1486 = vset.pattern.permute.xlu0 3
      %1487 = vperm.xlu0 %1486, %v1143
      %v1488 = vpop.permute.xlu0 %1487
      %1490 = vset.pattern.permute.xlu0 3
      %1491 = vperm.xlu0 %1490, %v1144
      %v1492 = vpop.permute.xlu0 %1491
      %1494 = vset.pattern.permute.xlu0 3
      %1495 = vperm.xlu0 %1494, %v1145
      %v1496 = vpop.permute.xlu0 %1495
      %1498 = vset.pattern.permute.xlu0 3
      %1499 = vperm.xlu0 %1498, %v1146
      %v1500 = vpop.permute.xlu0 %1499
      %1502 = vset.pattern.permute.xlu0 3
      %1503 = vperm.xlu0 %1502, %v1147
      %v1504 = vpop.permute.xlu0 %1503
      %1506 = vset.pattern.permute.xlu0 3
      %1507 = vperm.xlu0 %1506, %v1148
      %v1508 = vpop.permute.xlu0 %1507
      %1510 = vset.pattern.permute.xlu0 3
      %1511 = vperm.xlu0 %1510, %v1149
      %v1512 = vpop.permute.xlu0 %1511
      %1514 = vset.pattern.permute.xlu0 3
      %1515 = vperm.xlu0 %1514, %v1150
      %v1516 = vpop.permute.xlu0 %1515
      %1518 = vset.pattern.permute.xlu0 3
      %1519 = vperm.xlu0 %1518, %v1151
      %v1520 = vpop.permute.xlu0 %1519
      %1522 = vset.pattern.permute.xlu0 3
      %1523 = vperm.xlu0 %1522, %v1152
      %v1524 = vpop.permute.xlu0 %1523
      %1526 = vset.pattern.permute.xlu0 3
      %1527 = vperm.xlu0 %1526, %v1153
      %v1528 = vpop.permute.xlu0 %1527
      %1530 = vset.pattern.permute.xlu0 3
      %1531 = vperm.xlu0 %1530, %v1154
      %v1532 = vpop.permute.xlu0 %1531
      %1534 = vset.pattern.permute.xlu0 3
      %1535 = vperm.xlu0 %1534, %v1155
      %v1536 = vpop.permute.xlu0 %1535
      %v1538 = vlaneseq
      %v1539 = vshrl.u32 %v1538, 7
      %v1540 = vsub.s32 1, %v1539
      %v1541 = vrot.slane %v1173, %v1540
      %vm1542 = vcmp.gt.f32.partialorder %v1476, %v1541
      %vm1543 = vcmp.gt.f32.partialorder %v1480, %v1541
      %vm1544 = vcmp.gt.f32.partialorder %v1484, %v1541
      %vm1545 = vcmp.gt.f32.partialorder %v1488, %v1541
      %vm1546 = vcmp.gt.f32.partialorder %v1492, %v1541
      %vm1547 = vcmp.gt.f32.partialorder %v1496, %v1541
      %vm1548 = vcmp.gt.f32.partialorder %v1500, %v1541
      %vm1549 = vcmp.gt.f32.partialorder %v1504, %v1541
      %vm1550 = vcmp.gt.f32.partialorder %v1508, %v1541
      %vm1551 = vcmp.gt.f32.partialorder %v1512, %v1541
      %vm1552 = vcmp.gt.f32.partialorder %v1516, %v1541
      %vm1553 = vcmp.gt.f32.partialorder %v1520, %v1541
      %vm1554 = vcmp.gt.f32.partialorder %v1524, %v1541
      %vm1555 = vcmp.gt.f32.partialorder %v1528, %v1541
      %vm1556 = vcmp.gt.f32.partialorder %v1532, %v1541
      %vm1557 = vcmp.gt.f32.partialorder %v1536, %v1541
      %vm1558 = vmand %vm1458, %vm1542
      %vm1559 = vmand %vm1459, %vm1543
      %vm1560 = vmand %vm1460, %vm1544
      %vm1561 = vmand %vm1461, %vm1545
      %vm1562 = vmand %vm1462, %vm1546
      %vm1563 = vmand %vm1463, %vm1547
      %vm1564 = vmand %vm1464, %vm1548
      %vm1565 = vmand %vm1465, %vm1549
      %vm1566 = vmand %vm1466, %vm1550
      %vm1567 = vmand %vm1467, %vm1551
      %vm1568 = vmand %vm1468, %vm1552
      %vm1569 = vmand %vm1469, %vm1553
      %vm1570 = vmand %vm1470, %vm1554
      %vm1571 = vmand %vm1471, %vm1555
      %vm1572 = vmand %vm1472, %vm1556
      %vm1573 = vmand %vm1473, %vm1557
      %1575 = vset.pattern.permute.xlu0 0
      %1576 = vperm.xlu0 %1575, %v1157
      %v1577 = vpop.permute.xlu0 %1576
      %1580 = vset.pattern.permute.xlu0 0
      %1581 = vperm.xlu0 %1580, %v1158
      %v1582 = vpop.permute.xlu0 %1581
      %1585 = vset.pattern.permute.xlu0 0
      %1586 = vperm.xlu0 %1585, %v1159
      %v1587 = vpop.permute.xlu0 %1586
      %1590 = vset.pattern.permute.xlu0 0
      %1591 = vperm.xlu0 %1590, %v1160
      %v1592 = vpop.permute.xlu0 %1591
      %1595 = vset.pattern.permute.xlu0 0
      %1596 = vperm.xlu0 %1595, %v1161
      %v1597 = vpop.permute.xlu0 %1596
      %1600 = vset.pattern.permute.xlu0 0
      %1601 = vperm.xlu0 %1600, %v1162
      %v1602 = vpop.permute.xlu0 %1601
      %1605 = vset.pattern.permute.xlu0 0
      %1606 = vperm.xlu0 %1605, %v1163
      %v1607 = vpop.permute.xlu0 %1606
      %1610 = vset.pattern.permute.xlu0 0
      %1611 = vperm.xlu0 %1610, %v1164
      %v1612 = vpop.permute.xlu0 %1611
      %1615 = vset.pattern.permute.xlu0 0
      %1616 = vperm.xlu0 %1615, %v1165
      %v1617 = vpop.permute.xlu0 %1616
      %1620 = vset.pattern.permute.xlu0 0
      %1621 = vperm.xlu0 %1620, %v1166
      %v1622 = vpop.permute.xlu0 %1621
      %1625 = vset.pattern.permute.xlu0 0
      %1626 = vperm.xlu0 %1625, %v1167
      %v1627 = vpop.permute.xlu0 %1626
      %1630 = vset.pattern.permute.xlu0 0
      %1631 = vperm.xlu0 %1630, %v1168
      %v1632 = vpop.permute.xlu0 %1631
      %1635 = vset.pattern.permute.xlu0 0
      %1636 = vperm.xlu0 %1635, %v1169
      %v1637 = vpop.permute.xlu0 %1636
      %1640 = vset.pattern.permute.xlu0 0
      %1641 = vperm.xlu0 %1640, %v1170
      %v1642 = vpop.permute.xlu0 %1641
      %1645 = vset.pattern.permute.xlu0 0
      %1646 = vperm.xlu0 %1645, %v1171
      %v1647 = vpop.permute.xlu0 %1646
      %1650 = vset.pattern.permute.xlu0 0
      %1651 = vperm.xlu0 %1650, %v1172
      %v1652 = vpop.permute.xlu0 %1651
      %v1654 = vlaneseq
      %v1655 = vshrl.u32 %v1654, 7
      %v1656 = vsub.s32 2, %v1655
      %v1657 = vrot.slane %v1156, %v1656
      %vm1658 = vcmp.lt.f32.partialorder %v1577, %v1657
      %vm1659 = vcmp.lt.f32.partialorder %v1582, %v1657
      %vm1660 = vcmp.lt.f32.partialorder %v1587, %v1657
      %vm1661 = vcmp.lt.f32.partialorder %v1592, %v1657
      %vm1662 = vcmp.lt.f32.partialorder %v1597, %v1657
      %vm1663 = vcmp.lt.f32.partialorder %v1602, %v1657
      %vm1664 = vcmp.lt.f32.partialorder %v1607, %v1657
      %vm1665 = vcmp.lt.f32.partialorder %v1612, %v1657
      %vm1666 = vcmp.lt.f32.partialorder %v1617, %v1657
      %vm1667 = vcmp.lt.f32.partialorder %v1622, %v1657
      %vm1668 = vcmp.lt.f32.partialorder %v1627, %v1657
      %vm1669 = vcmp.lt.f32.partialorder %v1632, %v1657
      %vm1670 = vcmp.lt.f32.partialorder %v1637, %v1657
      %vm1671 = vcmp.lt.f32.partialorder %v1642, %v1657
      %vm1672 = vcmp.lt.f32.partialorder %v1647, %v1657
      %vm1673 = vcmp.lt.f32.partialorder %v1652, %v1657
      %1674 = vset.pattern.permute.xlu0 2
      %1675 = vperm.xlu0 %1674, %v1157
      %v1676 = vpop.permute.xlu0 %1675
      %1678 = vset.pattern.permute.xlu0 2
      %1679 = vperm.xlu0 %1678, %v1158
      %v1680 = vpop.permute.xlu0 %1679
      %1682 = vset.pattern.permute.xlu0 2
      %1683 = vperm.xlu0 %1682, %v1159
      %v1684 = vpop.permute.xlu0 %1683
      %1686 = vset.pattern.permute.xlu0 2
      %1687 = vperm.xlu0 %1686, %v1160
      %v1688 = vpop.permute.xlu0 %1687
      %1690 = vset.pattern.permute.xlu0 2
      %1691 = vperm.xlu0 %1690, %v1161
      %v1692 = vpop.permute.xlu0 %1691
      %1694 = vset.pattern.permute.xlu0 2
      %1695 = vperm.xlu0 %1694, %v1162
      %v1696 = vpop.permute.xlu0 %1695
      %1698 = vset.pattern.permute.xlu0 2
      %1699 = vperm.xlu0 %1698, %v1163
      %v1700 = vpop.permute.xlu0 %1699
      %1702 = vset.pattern.permute.xlu0 2
      %1703 = vperm.xlu0 %1702, %v1164
      %v1704 = vpop.permute.xlu0 %1703
      %1706 = vset.pattern.permute.xlu0 2
      %1707 = vperm.xlu0 %1706, %v1165
      %v1708 = vpop.permute.xlu0 %1707
      %1710 = vset.pattern.permute.xlu0 2
      %1711 = vperm.xlu0 %1710, %v1166
      %v1712 = vpop.permute.xlu0 %1711
      %1714 = vset.pattern.permute.xlu0 2
      %1715 = vperm.xlu0 %1714, %v1167
      %v1716 = vpop.permute.xlu0 %1715
      %1718 = vset.pattern.permute.xlu0 2
      %1719 = vperm.xlu0 %1718, %v1168
      %v1720 = vpop.permute.xlu0 %1719
      %1722 = vset.pattern.permute.xlu0 2
      %1723 = vperm.xlu0 %1722, %v1169
      %v1724 = vpop.permute.xlu0 %1723
      %1726 = vset.pattern.permute.xlu0 2
      %1727 = vperm.xlu0 %1726, %v1170
      %v1728 = vpop.permute.xlu0 %1727
      %1730 = vset.pattern.permute.xlu0 2
      %1731 = vperm.xlu0 %1730, %v1171
      %v1732 = vpop.permute.xlu0 %1731
      %1734 = vset.pattern.permute.xlu0 2
      %1735 = vperm.xlu0 %1734, %v1172
      %v1736 = vpop.permute.xlu0 %1735
      %v1738 = vlaneseq
      %v1739 = vshrl.u32 %v1738, 7
      %v1740 = vsub.s32 0, %v1739
      %v1741 = vrot.slane %v1156, %v1740
      %vm1742 = vcmp.gt.f32.partialorder %v1676, %v1741
      %vm1743 = vcmp.gt.f32.partialorder %v1680, %v1741
      %vm1744 = vcmp.gt.f32.partialorder %v1684, %v1741
      %vm1745 = vcmp.gt.f32.partialorder %v1688, %v1741
      %vm1746 = vcmp.gt.f32.partialorder %v1692, %v1741
      %vm1747 = vcmp.gt.f32.partialorder %v1696, %v1741
      %vm1748 = vcmp.gt.f32.partialorder %v1700, %v1741
      %vm1749 = vcmp.gt.f32.partialorder %v1704, %v1741
      %vm1750 = vcmp.gt.f32.partialorder %v1708, %v1741
      %vm1751 = vcmp.gt.f32.partialorder %v1712, %v1741
      %vm1752 = vcmp.gt.f32.partialorder %v1716, %v1741
      %vm1753 = vcmp.gt.f32.partialorder %v1720, %v1741
      %vm1754 = vcmp.gt.f32.partialorder %v1724, %v1741
      %vm1755 = vcmp.gt.f32.partialorder %v1728, %v1741
      %vm1756 = vcmp.gt.f32.partialorder %v1732, %v1741
      %vm1757 = vcmp.gt.f32.partialorder %v1736, %v1741
      %vm1758 = vmand %vm1658, %vm1742
      %vm1759 = vmand %vm1659, %vm1743
      %vm1760 = vmand %vm1660, %vm1744
      %vm1761 = vmand %vm1661, %vm1745
      %vm1762 = vmand %vm1662, %vm1746
      %vm1763 = vmand %vm1663, %vm1747
      %vm1764 = vmand %vm1664, %vm1748
      %vm1765 = vmand %vm1665, %vm1749
      %vm1766 = vmand %vm1666, %vm1750
      %vm1767 = vmand %vm1667, %vm1751
      %vm1768 = vmand %vm1668, %vm1752
      %vm1769 = vmand %vm1669, %vm1753
      %vm1770 = vmand %vm1670, %vm1754
      %vm1771 = vmand %vm1671, %vm1755
      %vm1772 = vmand %vm1672, %vm1756
      %vm1773 = vmand %vm1673, %vm1757
      %1774 = vset.pattern.permute.xlu0 1
      %1775 = vperm.xlu0 %1774, %v1157
      %v1776 = vpop.permute.xlu0 %1775
      %1778 = vset.pattern.permute.xlu0 1
      %1779 = vperm.xlu0 %1778, %v1158
      %v1780 = vpop.permute.xlu0 %1779
      %1782 = vset.pattern.permute.xlu0 1
      %1783 = vperm.xlu0 %1782, %v1159
      %v1784 = vpop.permute.xlu0 %1783
      %1786 = vset.pattern.permute.xlu0 1
      %1787 = vperm.xlu0 %1786, %v1160
      %v1788 = vpop.permute.xlu0 %1787
      %1790 = vset.pattern.permute.xlu0 1
      %1791 = vperm.xlu0 %1790, %v1161
      %v1792 = vpop.permute.xlu0 %1791
      %1794 = vset.pattern.permute.xlu0 1
      %1795 = vperm.xlu0 %1794, %v1162
      %v1796 = vpop.permute.xlu0 %1795
      %1798 = vset.pattern.permute.xlu0 1
      %1799 = vperm.xlu0 %1798, %v1163
      %v1800 = vpop.permute.xlu0 %1799
      %1802 = vset.pattern.permute.xlu0 1
      %1803 = vperm.xlu0 %1802, %v1164
      %v1804 = vpop.permute.xlu0 %1803
      %1806 = vset.pattern.permute.xlu0 1
      %1807 = vperm.xlu0 %1806, %v1165
      %v1808 = vpop.permute.xlu0 %1807
      %1810 = vset.pattern.permute.xlu0 1
      %1811 = vperm.xlu0 %1810, %v1166
      %v1812 = vpop.permute.xlu0 %1811
      %1814 = vset.pattern.permute.xlu0 1
      %1815 = vperm.xlu0 %1814, %v1167
      %v1816 = vpop.permute.xlu0 %1815
      %1818 = vset.pattern.permute.xlu0 1
      %1819 = vperm.xlu0 %1818, %v1168
      %v1820 = vpop.permute.xlu0 %1819
      %1822 = vset.pattern.permute.xlu0 1
      %1823 = vperm.xlu0 %1822, %v1169
      %v1824 = vpop.permute.xlu0 %1823
      %1826 = vset.pattern.permute.xlu0 1
      %1827 = vperm.xlu0 %1826, %v1170
      %v1828 = vpop.permute.xlu0 %1827
      %1830 = vset.pattern.permute.xlu0 1
      %1831 = vperm.xlu0 %1830, %v1171
      %v1832 = vpop.permute.xlu0 %1831
      %1834 = vset.pattern.permute.xlu0 1
      %1835 = vperm.xlu0 %1834, %v1172
      %v1836 = vpop.permute.xlu0 %1835
      %v1838 = vlaneseq
      %v1839 = vshrl.u32 %v1838, 7
      %v1840 = vsub.s32 3, %v1839
      %v1841 = vrot.slane %v1156, %v1840
      %vm1842 = vcmp.lt.f32.partialorder %v1776, %v1841
      %vm1843 = vcmp.lt.f32.partialorder %v1780, %v1841
      %vm1844 = vcmp.lt.f32.partialorder %v1784, %v1841
      %vm1845 = vcmp.lt.f32.partialorder %v1788, %v1841
      %vm1846 = vcmp.lt.f32.partialorder %v1792, %v1841
      %vm1847 = vcmp.lt.f32.partialorder %v1796, %v1841
      %vm1848 = vcmp.lt.f32.partialorder %v1800, %v1841
      %vm1849 = vcmp.lt.f32.partialorder %v1804, %v1841
      %vm1850 = vcmp.lt.f32.partialorder %v1808, %v1841
      %vm1851 = vcmp.lt.f32.partialorder %v1812, %v1841
      %vm1852 = vcmp.lt.f32.partialorder %v1816, %v1841
      %vm1853 = vcmp.lt.f32.partialorder %v1820, %v1841
      %vm1854 = vcmp.lt.f32.partialorder %v1824, %v1841
      %vm1855 = vcmp.lt.f32.partialorder %v1828, %v1841
      %vm1856 = vcmp.lt.f32.partialorder %v1832, %v1841
      %vm1857 = vcmp.lt.f32.partialorder %v1836, %v1841
      %vm1858 = vmand %vm1758, %vm1842
      %vm1859 = vmand %vm1759, %vm1843
      %vm1860 = vmand %vm1760, %vm1844
      %vm1861 = vmand %vm1761, %vm1845
      %vm1862 = vmand %vm1762, %vm1846
      %vm1863 = vmand %vm1763, %vm1847
      %vm1864 = vmand %vm1764, %vm1848
      %vm1865 = vmand %vm1765, %vm1849
      %vm1866 = vmand %vm1766, %vm1850
      %vm1867 = vmand %vm1767, %vm1851
      %vm1868 = vmand %vm1768, %vm1852
      %vm1869 = vmand %vm1769, %vm1853
      %vm1870 = vmand %vm1770, %vm1854
      %vm1871 = vmand %vm1771, %vm1855
      %vm1872 = vmand %vm1772, %vm1856
      %vm1873 = vmand %vm1773, %vm1857
      %1874 = vset.pattern.permute.xlu0 3
      %1875 = vperm.xlu0 %1874, %v1157
      %v1876 = vpop.permute.xlu0 %1875
      %1878 = vset.pattern.permute.xlu0 3
      %1879 = vperm.xlu0 %1878, %v1158
      %v1880 = vpop.permute.xlu0 %1879
      %1882 = vset.pattern.permute.xlu0 3
      %1883 = vperm.xlu0 %1882, %v1159
      %v1884 = vpop.permute.xlu0 %1883
      %1886 = vset.pattern.permute.xlu0 3
      %1887 = vperm.xlu0 %1886, %v1160
      %v1888 = vpop.permute.xlu0 %1887
      %1890 = vset.pattern.permute.xlu0 3
      %1891 = vperm.xlu0 %1890, %v1161
      %v1892 = vpop.permute.xlu0 %1891
      %1894 = vset.pattern.permute.xlu0 3
      %1895 = vperm.xlu0 %1894, %v1162
      %v1896 = vpop.permute.xlu0 %1895
      %1898 = vset.pattern.permute.xlu0 3
      %1899 = vperm.xlu0 %1898, %v1163
      %v1900 = vpop.permute.xlu0 %1899
      %1902 = vset.pattern.permute.xlu0 3
      %1903 = vperm.xlu0 %1902, %v1164
      %v1904 = vpop.permute.xlu0 %1903
      %1906 = vset.pattern.permute.xlu0 3
      %1907 = vperm.xlu0 %1906, %v1165
      %v1908 = vpop.permute.xlu0 %1907
      %1910 = vset.pattern.permute.xlu0 3
      %1911 = vperm.xlu0 %1910, %v1166
      %v1912 = vpop.permute.xlu0 %1911
      %1914 = vset.pattern.permute.xlu0 3
      %1915 = vperm.xlu0 %1914, %v1167
      %v1916 = vpop.permute.xlu0 %1915
      %1918 = vset.pattern.permute.xlu0 3
      %1919 = vperm.xlu0 %1918, %v1168
      %v1920 = vpop.permute.xlu0 %1919
      %1922 = vset.pattern.permute.xlu0 3
      %1923 = vperm.xlu0 %1922, %v1169
      %v1924 = vpop.permute.xlu0 %1923
      %1926 = vset.pattern.permute.xlu0 3
      %1927 = vperm.xlu0 %1926, %v1170
      %v1928 = vpop.permute.xlu0 %1927
      %1930 = vset.pattern.permute.xlu0 3
      %1931 = vperm.xlu0 %1930, %v1171
      %v1932 = vpop.permute.xlu0 %1931
      %1934 = vset.pattern.permute.xlu0 3
      %1935 = vperm.xlu0 %1934, %v1172
      %v1936 = vpop.permute.xlu0 %1935
      %v1938 = vlaneseq
      %v1939 = vshrl.u32 %v1938, 7
      %v1940 = vsub.s32 1, %v1939
      %v1941 = vrot.slane %v1156, %v1940
      %vm1942 = vcmp.gt.f32.partialorder %v1876, %v1941
      %vm1943 = vcmp.gt.f32.partialorder %v1880, %v1941
      %vm1944 = vcmp.gt.f32.partialorder %v1884, %v1941
      %vm1945 = vcmp.gt.f32.partialorder %v1888, %v1941
      %vm1946 = vcmp.gt.f32.partialorder %v1892, %v1941
      %vm1947 = vcmp.gt.f32.partialorder %v1896, %v1941
      %vm1948 = vcmp.gt.f32.partialorder %v1900, %v1941
      %vm1949 = vcmp.gt.f32.partialorder %v1904, %v1941
      %vm1950 = vcmp.gt.f32.partialorder %v1908, %v1941
      %vm1951 = vcmp.gt.f32.partialorder %v1912, %v1941
      %vm1952 = vcmp.gt.f32.partialorder %v1916, %v1941
      %vm1953 = vcmp.gt.f32.partialorder %v1920, %v1941
      %vm1954 = vcmp.gt.f32.partialorder %v1924, %v1941
      %vm1955 = vcmp.gt.f32.partialorder %v1928, %v1941
      %vm1956 = vcmp.gt.f32.partialorder %v1932, %v1941
      %vm1957 = vcmp.gt.f32.partialorder %v1936, %v1941
      %vm1958 = vmand %vm1858, %vm1942
      %vm1959 = vmand %vm1859, %vm1943
      %vm1960 = vmand %vm1860, %vm1944
      %vm1961 = vmand %vm1861, %vm1945
      %vm1962 = vmand %vm1862, %vm1946
      %vm1963 = vmand %vm1863, %vm1947
      %vm1964 = vmand %vm1864, %vm1948
      %vm1965 = vmand %vm1865, %vm1949
      %vm1966 = vmand %vm1866, %vm1950
      %vm1967 = vmand %vm1867, %vm1951
      %vm1968 = vmand %vm1868, %vm1952
      %vm1969 = vmand %vm1869, %vm1953
      %vm1970 = vmand %vm1870, %vm1954
      %vm1971 = vmand %vm1871, %vm1955
      %vm1972 = vmand %vm1872, %vm1956
      %vm1973 = vmand %vm1873, %vm1957
      %v1974 = vsel %vm1558, 0.0, -100000.0
      %v1975 = vsel %vm1559, 0.0, -100000.0
      %v1976 = vsel %vm1560, 0.0, -100000.0
      %v1977 = vsel %vm1561, 0.0, -100000.0
      %v1978 = vsel %vm1562, 0.0, -100000.0
      %v1979 = vsel %vm1563, 0.0, -100000.0
      %v1980 = vsel %vm1564, 0.0, -100000.0
      %v1981 = vsel %vm1565, 0.0, -100000.0
      %v1982 = vsel %vm1566, 0.0, -100000.0
      %v1983 = vsel %vm1567, 0.0, -100000.0
      %v1984 = vsel %vm1568, 0.0, -100000.0
      %v1985 = vsel %vm1569, 0.0, -100000.0
      %v1986 = vsel %vm1570, 0.0, -100000.0
      %v1987 = vsel %vm1571, 0.0, -100000.0
      %v1988 = vsel %vm1572, 0.0, -100000.0
      %v1989 = vsel %vm1573, 0.0, -100000.0
      %v1990 = vsel %vm1958, 0.0, -100000.0
      %v1991 = vsel %vm1959, 0.0, -100000.0
      %v1992 = vsel %vm1960, 0.0, -100000.0
      %v1993 = vsel %vm1961, 0.0, -100000.0
      %v1994 = vsel %vm1962, 0.0, -100000.0
      %v1995 = vsel %vm1963, 0.0, -100000.0
      %v1996 = vsel %vm1964, 0.0, -100000.0
      %v1997 = vsel %vm1965, 0.0, -100000.0
      %v1998 = vsel %vm1966, 0.0, -100000.0
      %v1999 = vsel %vm1967, 0.0, -100000.0
      %v2000 = vsel %vm1968, 0.0, -100000.0
      %v2001 = vsel %vm1969, 0.0, -100000.0
      %v2002 = vsel %vm1970, 0.0, -100000.0
      %v2003 = vsel %vm1971, 0.0, -100000.0
      %v2004 = vsel %vm1972, 0.0, -100000.0
      %v2005 = vsel %vm1973, 0.0, -100000.0
      %v2006 = vlaneseq
      %v2007 = vshrl.u32 %v2006, 7
      %v2008 = vsub.s32 0, %v2007
      %v2009 = vrot.slane %v1135, %v2008
      %2010 = vst [vmem:[%s599] sm:$0xff] %v2009
      %2011 = vst [vmem:[%s599 + $0x10] sm:$0xff] %v2009
      %2012 = vst [vmem:[%s599 + $0x20] sm:$0xff] %v2009
      %2013 = vst [vmem:[%s599 + $0x30] sm:$0xff] %v2009
      %2014 = vst [vmem:[%s599 + $0x40] sm:$0xff] %v2009
      %2015 = vst [vmem:[%s599 + $0x50] sm:$0xff] %v2009
      %2016 = vst [vmem:[%s599 + $0x60] sm:$0xff] %v2009
      %2017 = vst [vmem:[%s599 + $0x70] sm:$0xff] %v2009
      %2018 = vst [vmem:[%s599 + $0x80] sm:$0xff] %v2009
      %2019 = vst [vmem:[%s599 + $0x90] sm:$0xff] %v2009
      %2020 = vst [vmem:[%s599 + $0xa0] sm:$0xff] %v2009
      %2021 = vst [vmem:[%s599 + $0xb0] sm:$0xff] %v2009
      %2022 = vst [vmem:[%s599 + $0xc0] sm:$0xff] %v2009
      %2023 = vst [vmem:[%s599 + $0xd0] sm:$0xff] %v2009
      %2024 = vst [vmem:[%s599 + $0xe0] sm:$0xff] %v2009
      %2025 = vst [vmem:[%s599 + $0xf0] sm:$0xff] %v2009
      %2026 = vst [vmem:[%s599 + $0x8] sm:$0xff] %v1974
      %2027 = vst [vmem:[%s599 + $0x18] sm:$0xff] %v1975
      %2028 = vst [vmem:[%s599 + $0x28] sm:$0xff] %v1976
      %2029 = vst [vmem:[%s599 + $0x38] sm:$0xff] %v1977
      %2030 = vst [vmem:[%s599 + $0x48] sm:$0xff] %v1978
      %2031 = vst [vmem:[%s599 + $0x58] sm:$0xff] %v1979
      %2032 = vst [vmem:[%s599 + $0x68] sm:$0xff] %v1980
      %2033 = vst [vmem:[%s599 + $0x78] sm:$0xff] %v1981
      %2034 = vst [vmem:[%s599 + $0x88] sm:$0xff] %v1982
      %2035 = vst [vmem:[%s599 + $0x98] sm:$0xff] %v1983
      %2036 = vst [vmem:[%s599 + $0xa8] sm:$0xff] %v1984
      %2037 = vst [vmem:[%s599 + $0xb8] sm:$0xff] %v1985
      %2038 = vst [vmem:[%s599 + $0xc8] sm:$0xff] %v1986
      %2039 = vst [vmem:[%s599 + $0xd8] sm:$0xff] %v1987
      %2040 = vst [vmem:[%s599 + $0xe8] sm:$0xff] %v1988
      %2041 = vst [vmem:[%s599 + $0xf8] sm:$0xff] %v1989
      %2042 = vst [vmem:[%s604] sm:$0xff] %v1990
      %2043 = vst [vmem:[%s604 + $0x10] sm:$0xff] %v1991
      %2044 = vst [vmem:[%s604 + $0x20] sm:$0xff] %v1992
      %2045 = vst [vmem:[%s604 + $0x30] sm:$0xff] %v1993
      %2046 = vst [vmem:[%s604 + $0x40] sm:$0xff] %v1994
      %2047 = vst [vmem:[%s604 + $0x50] sm:$0xff] %v1995
      %2048 = vst [vmem:[%s604 + $0x60] sm:$0xff] %v1996
      %2049 = vst [vmem:[%s604 + $0x70] sm:$0xff] %v1997
      %2050 = vst [vmem:[%s604 + $0x80] sm:$0xff] %v1998
      %2051 = vst [vmem:[%s604 + $0x90] sm:$0xff] %v1999
      %2052 = vst [vmem:[%s604 + $0xa0] sm:$0xff] %v2000
      %2053 = vst [vmem:[%s604 + $0xb0] sm:$0xff] %v2001
      %2054 = vst [vmem:[%s604 + $0xc0] sm:$0xff] %v2002
      %2055 = vst [vmem:[%s604 + $0xd0] sm:$0xff] %v2003
      %2056 = vst [vmem:[%s604 + $0xe0] sm:$0xff] %v2004
      %2057 = vst [vmem:[%s604 + $0xf0] sm:$0xff] %v2005
      %v2058 = vlaneseq
      %v2059 = vshrl.u32 %v2058, 7
      %v2060 = vsub.s32 0, %v2059
      %v2061 = vrot.slane %v1137, %v2060
      %2062 = vst [vmem:[%s604 + $0x8] sm:$0xff] %v2061
      %2063 = vst [vmem:[%s604 + $0x18] sm:$0xff] %v2061
      %2064 = vst [vmem:[%s604 + $0x28] sm:$0xff] %v2061
      %2065 = vst [vmem:[%s604 + $0x38] sm:$0xff] %v2061
      %2066 = vst [vmem:[%s604 + $0x48] sm:$0xff] %v2061
      %2067 = vst [vmem:[%s604 + $0x58] sm:$0xff] %v2061
      %2068 = vst [vmem:[%s604 + $0x68] sm:$0xff] %v2061
      %2069 = vst [vmem:[%s604 + $0x78] sm:$0xff] %v2061
      %2070 = vst [vmem:[%s604 + $0x88] sm:$0xff] %v2061
      %2071 = vst [vmem:[%s604 + $0x98] sm:$0xff] %v2061
      %2072 = vst [vmem:[%s604 + $0xa8] sm:$0xff] %v2061
      %2073 = vst [vmem:[%s604 + $0xb8] sm:$0xff] %v2061
      %2074 = vst [vmem:[%s604 + $0xc8] sm:$0xff] %v2061
      %2075 = vst [vmem:[%s604 + $0xd8] sm:$0xff] %v2061
      %2076 = vst [vmem:[%s604 + $0xe8] sm:$0xff] %v2061
      %2077 = vst [vmem:[%s604 + $0xf8] sm:$0xff] %v2061
      %p2078 = scmp.lt.s32.totalorder %s27, 1
      %s2079 = scalar_select %p2078, %s27, 1
      %s2080 = smul.addr %s2079, 16
      %s2081 = smul.addr %s2080, 8
      %s2082 = scalar_lea.vmem %s10, %s2081
      %p2083 = scmp.lt.s32.totalorder %s27, 1
      %s2084 = scalar_select %p2083, %s27, 1
      %s2085 = smul.addr %s2084, 16
      %s2086 = smul.addr %s2085, 8
      %s2087 = scalar_lea.vmem %s11, %s2086
      %p2088 = scmp.lt.s32.totalorder %s27, 1
      %s2089 = scalar_select %p2088, %s27, 1
      %s2090 = scalar_lea.vmem %s12, %s2089
      %p2091 = scmp.lt.s32.totalorder %s27, 1
      %s2092 = scalar_select %p2091, %s27, 1
      %s2093 = scalar_lea.vmem %s13, %s2092
      %p2094 = scmp.lt.s32.totalorder %s27, 1
      %s2095 = scalar_select %p2094, %s27, 1
      %s2096 = smul.addr %s2095, 32
      %s2097 = smul.addr %s2096, 8
      %s2098 = scalar_lea.vmem %s14, %s2097
      %p2099 = scmp.lt.s32.totalorder %s27, 1
      %s2100 = scalar_select %p2099, %s27, 1
      %s2101 = smul.addr %s2100, 32
      %s2102 = smul.addr %s2101, 8
      %s2103 = scalar_lea.vmem %s15, %s2102
      // Predicated region
      $region61: #{geometric_dual_feature_embedding.1} parent=59 // pred_check
        %p2104 = pneg %p275
      $region62: #{geometric_dual_feature_embedding.1} parent=59 // pred_check_branch
        %2106 = sbr.rel (%p2104) target = $region64
      $region63: #{geometric_dual_feature_embedding.1} parent=59 // pred_region
        _
      $region64: #{geometric_dual_feature_embedding.1} parent=59 // pred_fallthru
        _
      // Predicated region
      $region65: #{geometric_dual_feature_embedding.1} parent=59 // pred_check
        %p2107 = pneg %p301
      $region66: #{geometric_dual_feature_embedding.1} parent=59 // pred_check_branch
        %2109 = sbr.rel (%p2107) target = $region68
      $region67: #{geometric_dual_feature_embedding.1} parent=59 // pred_region
        _
      $region68: #{geometric_dual_feature_embedding.1} parent=59 // pred_fallthru
        _
      // Predicated region
      $region69: #{geometric_dual_feature_embedding.1} parent=59 // pred_check
        %p2110 = pneg %p327
      $region70: #{geometric_dual_feature_embedding.1} parent=59 // pred_check_branch
        %2112 = sbr.rel (%p2110) target = $region72
      $region71: #{geometric_dual_feature_embedding.1} parent=59 // pred_region
        _
      $region72: #{geometric_dual_feature_embedding.1} parent=59 // pred_fallthru
        _
      // Predicated region
      $region73: #{geometric_dual_feature_embedding.1} parent=59 // pred_check
        %p2113 = pneg %p353
      $region74: #{geometric_dual_feature_embedding.1} parent=59 // pred_check_branch
        %2115 = sbr.rel (%p2113) target = $region76
      $region75: #{geometric_dual_feature_embedding.1} parent=59 // pred_region
        _
      $region76: #{geometric_dual_feature_embedding.1} parent=59 // pred_fallthru
        _
      // Predicated region
      $region77: #{geometric_dual_feature_embedding.1} parent=59 // pred_check
        %p2116 = pneg %p379
      $region78: #{geometric_dual_feature_embedding.1} parent=59 // pred_check_branch
        %2118 = sbr.rel (%p2116) target = $region80
      $region79: #{geometric_dual_feature_embedding.1} parent=59 // pred_region
        _
      $region80: #{geometric_dual_feature_embedding.1} parent=59 // pred_fallthru
        _
      // Predicated region
      $region81: #{geometric_dual_feature_embedding.1} parent=59 // pred_check
        %p2119 = pneg %p405
      $region82: #{geometric_dual_feature_embedding.1} parent=59 // pred_check_branch
        %2121 = sbr.rel (%p2119) target = $region84
      $region83: #{geometric_dual_feature_embedding.1} parent=59 // pred_region
        _
      $region84: #{geometric_dual_feature_embedding.1} parent=59 // pred_fallthru
        _
    $region60: #{geometric_dual_feature_embedding.1} parent=5 // pred_fallthru
      _
    %p2122 = scmp.le.s32.totalorder 2, %s22
    // Predicated region
    $region85: #{geometric_dual_feature_embedding.1} parent=5 // pred_check
      %p2123 = pneg %p2122
    $region86: #{geometric_dual_feature_embedding.1} parent=5 // pred_check_branch
      %2125 = sbr.rel (%p2123) target = $region88
    $region87: #{geometric_dual_feature_embedding.1} parent=5 // pred_region
      %s2126 = ssub.s32 %s22, 2
      // Predicated region
      $region89: #{geometric_dual_feature_embedding.1} parent=87 // pred_check
        %p2127 = pneg %p281
      $region90: #{geometric_dual_feature_embedding.1} parent=87 // pred_check_branch
        %2129 = sbr.rel (%p2127) target = $region92
      $region91: #{geometric_dual_feature_embedding.1} parent=87 // pred_region
        %p2130 = scmp.lt.s32.totalorder %s28, 1
        %s2131 = scalar_select %p2130, %s28, 1
        %s2132 = smul.addr %s2131, 16
        %s2133 = smul.addr %s2132, 8
        %s2134 = scalar_lea.vmem %s10, %s2133
      $region92: #{geometric_dual_feature_embedding.1} parent=87 // pred_fallthru
        _
      // Predicated region
      $region93: #{geometric_dual_feature_embedding.1} parent=87 // pred_check
        %p2135 = pneg %p307
      $region94: #{geometric_dual_feature_embedding.1} parent=87 // pred_check_branch
        %2137 = sbr.rel (%p2135) target = $region96
      $region95: #{geometric_dual_feature_embedding.1} parent=87 // pred_region
        %p2138 = scmp.lt.s32.totalorder %s28, 1
        %s2139 = scalar_select %p2138, %s28, 1
        %s2140 = smul.addr %s2139, 16
        %s2141 = smul.addr %s2140, 8
        %s2142 = scalar_lea.vmem %s11, %s2141
      $region96: #{geometric_dual_feature_embedding.1} parent=87 // pred_fallthru
        _
      // Predicated region
      $region97: #{geometric_dual_feature_embedding.1} parent=87 // pred_check
        %p2143 = pneg %p333
      $region98: #{geometric_dual_feature_embedding.1} parent=87 // pred_check_branch
        %2145 = sbr.rel (%p2143) target = $region100
      $region99: #{geometric_dual_feature_embedding.1} parent=87 // pred_region
        %p2146 = scmp.lt.s32.totalorder %s28, 1
        %s2147 = scalar_select %p2146, %s28, 1
        %s2148 = scalar_lea.vmem %s12, %s2147
      $region100: #{geometric_dual_feature_embedding.1} parent=87 // pred_fallthru
        _
      // Predicated region
      $region101: #{geometric_dual_feature_embedding.1} parent=87 // pred_check
        %p2149 = pneg %p359
      $region102: #{geometric_dual_feature_embedding.1} parent=87 // pred_check_branch
        %2151 = sbr.rel (%p2149) target = $region104
      $region103: #{geometric_dual_feature_embedding.1} parent=87 // pred_region
        %p2152 = scmp.lt.s32.totalorder %s28, 1
        %s2153 = scalar_select %p2152, %s28, 1
        %s2154 = scalar_lea.vmem %s13, %s2153
      $region104: #{geometric_dual_feature_embedding.1} parent=87 // pred_fallthru
        _
      // Predicated region
      $region105: #{geometric_dual_feature_embedding.1} parent=87 // pred_check
        %p2155 = pneg %p385
      $region106: #{geometric_dual_feature_embedding.1} parent=87 // pred_check_branch
        %2157 = sbr.rel (%p2155) target = $region108
      $region107: #{geometric_dual_feature_embedding.1} parent=87 // pred_region
        %p2158 = scmp.lt.s32.totalorder %s28, 1
        %s2159 = scalar_select %p2158, %s28, 1
        %s2160 = smul.addr %s2159, 32
        %s2161 = smul.addr %s2160, 8
        %s2162 = scalar_lea.vmem %s14, %s2161
      $region108: #{geometric_dual_feature_embedding.1} parent=87 // pred_fallthru
        _
      // Predicated region
      $region109: #{geometric_dual_feature_embedding.1} parent=87 // pred_check
        %p2163 = pneg %p411
      $region110: #{geometric_dual_feature_embedding.1} parent=87 // pred_check_branch
        %2165 = sbr.rel (%p2163) target = $region112
      $region111: #{geometric_dual_feature_embedding.1} parent=87 // pred_region
        %p2166 = scmp.lt.s32.totalorder %s28, 1
        %s2167 = scalar_select %p2166, %s28, 1
        %s2168 = smul.addr %s2167, 32
        %s2169 = smul.addr %s2168, 8
        %s2170 = scalar_lea.vmem %s15, %s2169
      $region112: #{geometric_dual_feature_embedding.1} parent=87 // pred_fallthru
        _
    $region88: #{geometric_dual_feature_embedding.1} parent=5 // pred_fallthru
      _
  $region6: #{geometric_dual_feature_embedding.1} parent=0 // loop_footer
    %s26 = sadd.s32 1, %s22
  $region7: #{geometric_dual_feature_embedding.1} parent=0 // loop_footer_branch
    %21 = sbr.rel target = $region3
  $region8: #{geometric_dual_feature_embedding.1} parent=0 // loop_exit
    _

</llo_original>
